<compile_context>
chip_gen: v7x
topology: tpu7x:2x2x1
jax: 0.10.0
libtpu: 0.0.40
codegen_flags: <defaults>
</compile_context>

<pallas_src>
import functools

import jax
import jax.numpy as jnp
from jax import lax
from jax.experimental import pallas as pl
from jax.experimental.pallas import tpu as pltpu


def _spatial_attention_kernel(w_ref, rc_ref, x_ref, o_ref, sum_sc, max_sc, *,
                              C, CK, CB, H, W, HWp, K, PAD, TB, HOIST):
    """One grid step = (TB batch elements) x (CK channels).

    w_ref  : SMEM (2*K*K,) f32    flattened conv weight [c, kh, kw]
    rc_ref : VMEM (2, HWp) i32    row / col index of each flattened position
    x_ref  : VMEM (TB, CK, HWp)   input slab (native dtype)
    o_ref  : VMEM (1, TB, HWp)    output slab
    sum_sc : VMEM (TB, HWp) f32   running channel sum
    max_sc : VMEM (TB, HWp) f32   running channel max
    """
    c_step = pl.program_id(1)
    n_csteps = pl.num_programs(1)

    # ---- init running accumulators at the first channel block --------------
    @pl.when(c_step == 0)
    def _init():
        sum_sc[...] = jnp.zeros_like(sum_sc)
        max_sc[...] = jnp.full_like(max_sc, -jnp.inf)

    # ---- partial channel reduction over this step's CK channels ------------
    # Chunked over CB channels to bound live vregs; sum accumulates in f32,
    # max stays in the native dtype until the (TB, HWp) result.
    n_chunks = CK // CB
    if n_chunks <= 8:
        # Small trip count: unroll statically (same effect as unroll=True).
        s = None
        m = None
        for ci in range(n_chunks):
            chunk = x_ref[:, pl.ds(ci * CB, CB), :]           # (TB, CB, HWp)
            cs = jnp.sum(chunk, axis=1, dtype=jnp.float32)
            cm = jnp.max(chunk, axis=1)
            s = cs if s is None else s + cs
            m = cm if m is None else jnp.maximum(m, cm)
        m = m.astype(jnp.float32)
    else:
        def body(ci, carry):
            s_acc, m_acc = carry
            start = pl.multiple_of(ci * CB, CB)
            chunk = x_ref[:, pl.ds(start, CB), :]             # (TB, CB, HWp)
            s_acc = s_acc + jnp.sum(chunk, axis=1, dtype=jnp.float32)
            m_acc = jnp.maximum(m_acc, jnp.max(chunk, axis=1))
            return s_acc, m_acc

        s, m = lax.fori_loop(
            0, n_chunks, body,
            (jnp.zeros((TB, HWp), jnp.float32),
             jnp.full((TB, HWp), -jnp.inf, x_ref.dtype)))
        m = m.astype(jnp.float32)

    sum_sc[...] = sum_sc[...] + s
    max_sc[...] = jnp.maximum(max_sc[...], m)

    # ---- last channel block: 7x7 conv on [avg, max] + sigmoid + store ------
    @pl.when(c_step == n_csteps - 1)
    def _finalize():
        avg = sum_sc[...] * (1.0 / C)                         # (TB, HWp) f32
        mx = max_sc[...]

        # SMEM weight scalars, read once per grid step (outside FMA loops).
        wv = [[[w_ref[(cc * K + kh) * K + kw] for kw in range(K)]
               for kh in range(K)] for cc in range(2)]

        rc = rc_ref[...]                                      # (2, HWp) i32
        row = rc[0:1, :]                                      # (1, HWp)
        col = rc[1:2, :]                                      # (1, HWp)

        # Validity masks (shared by both maps): one per off-center kw / kh.
        col_mask = {}
        for kw in range(K):
            dw = kw - PAD
            if dw != 0:
                cd = col + dw
                col_mask[kw] = jnp.logical_and(cd >= 0, cd < W)
        row_mask = {}
        for kh in range(K):
            dh = kh - PAD
            if dh != 0:
                rd = row + dh
                row_mask[kh] = jnp.logical_and(rd >= 0, rd < H)

        def lane_shift(v, d):
            # y[..., p] = v[..., (p + d) mod HWp]; wrapped / out-of-row lanes
            # are zeroed by the caller's mask (HWp is a multiple of W's rows
            # only through the masks, never through the data itself).
            s_amt = (-d) % HWp
            if s_amt == 0:
                return v
            return pltpu.roll(v, s_amt, axis=1)

        def shifted_col(cmap, kw):
            dw = kw - PAD
            v = lane_shift(cmap, dw)
            if dw != 0:
                v = jnp.where(col_mask[kw], v, 0.0)
            return v

        maps = (avg, mx)
        if HOIST:  # 14 kw-shifted maps fit in vregs: compute them once.
            sh = [[shifted_col(maps[cc], kw) for kw in range(K)]
                  for cc in range(2)]

        out = None
        for kh in range(K):
            dh = kh - PAD
            t = None
            for cc in range(2):
                for kw in range(K):
                    v = sh[cc][kw] if HOIST else shifted_col(maps[cc], kw)
                    term = v * wv[cc][kh][kw]
                    t = term if t is None else t + term
            # Row shift = lane shift by dh*W on the flattened map; the row
            # mask implements the padded-conv boundary rows.
            r = lane_shift(t, dh * W)
            if dh != 0:
                r = jnp.where(row_mask[kh], r, 0.0)
            out = r if out is None else out + r

        o_ref[0] = jax.nn.sigmoid(out).astype(o_ref.dtype)


def spatial_attention(x, weight, kernel_size=7):
    """x: (B, C, H, W); weight: (1, 2, K, K) (PyTorch OIHW conv layout)."""
    assert kernel_size in (3, 7), "kernel size must be 3 or 7"
    pad = 3 if kernel_size == 7 else 1
    B, C, H, W = x.shape
    K = kernel_size
    HW = H * W
    HWp = ((HW + 127) // 128) * 128          # lane-dense flattened map width
    itemsize = x.dtype.itemsize

    # ---- per-generation VMEM budgets ---------------------------------------
    try:
        info = pltpu.get_tpu_info()
        vmem_cap = getattr(info, "vmem_capacity_bytes", None)
    except Exception:
        vmem_cap = None
    if not vmem_cap:
        vmem_cap = 64 * 1024 * 1024          # conservative fallback (v7x-sized)
    vmem_limit = int(vmem_cap * 0.85)        # headroom for compiler scratch
    x_budget = (vmem_cap * 3) // 8           # double-buffered x-block budget

    # ---- batch block: amortize per-step overhead, keep >= 2 grid steps -----
    # Cap TB at B//2 so the "parallel" batch axis has at least two steps and
    # both v7x TensorCores get work.
    tb_max = max(1, B // 2) if B >= 2 else 1
    # TODO(synk): when B == 1, split H across the two v7x TensorCores with a
    # (K-1)//2-row halo instead of leaving one core idle.
    TB = 1
    for tb in range(1, tb_max + 1):
        if B % tb == 0 and 2 * tb * C * HWp * itemsize <= x_budget:
            TB = tb

    # ---- channel block: split C over a trailing "arbitrary" axis if needed --
    granule = 8 * max(1, 4 // itemsize)      # sublane granule: 8 f32 / 16 bf16
    if 2 * TB * C * HWp * itemsize <= x_budget:
        CK = C
    else:
        CK = 0
        for ck in range(granule, C, granule):
            if C % ck == 0 and 2 * TB * ck * HWp * itemsize <= x_budget:
                CK = ck                      # keep the largest fitting divisor
        if CK == 0:
            CK = granule if C % granule == 0 else C
            # TODO(synk): if C is not a multiple of the sublane granule and the
            # full-C slab exceeds the VMEM budget, pad C in the wrapper.
    NC = C // CK
    assert NC * CK == C

    # ---- in-step channel chunk: multiple of the granule, never 1 -----------
    elems_budget = 32768                     # ~128 KiB of f32-equivalent live data
    cb_target = max(granule,
                    (elems_budget // max(1, TB * HWp)) // granule * granule)
    CB = CK
    if CK > cb_target:
        best = 0
        for cb in range(granule, cb_target + 1, granule):
            if CK % cb == 0:
                best = cb
        if best:
            CB = best

    # Hoist the 14 kw-shifted maps only when they fit comfortably in vregs;
    # otherwise recompute them per kh (XLU has slack, avoids spills).
    HOIST = TB * HWp <= 2048

    # ---- host-side inputs ----------------------------------------------------
    w_flat = weight.reshape(2 * K * K).astype(jnp.float32)
    x_flat = x.reshape(B, C, HW)
    if HWp != HW:
        x_flat = jnp.pad(x_flat, ((0, 0), (0, 0), (0, HWp - HW)))
    pos = jnp.arange(HWp, dtype=jnp.int32)
    rowcol = jnp.stack([pos // W, pos % W], axis=0)          # (2, HWp) i32

    kernel = functools.partial(
        _spatial_attention_kernel, C=C, CK=CK, CB=CB, H=H, W=W, HWp=HWp,
        K=K, PAD=pad, TB=TB, HOIST=HOIST)

    out = pl.pallas_call(
        kernel,
        out_shape=jax.ShapeDtypeStruct((B // TB, TB, HWp), x.dtype),
        grid_spec=pltpu.PrefetchScalarGridSpec(
            num_scalar_prefetch=0,
            grid=(B // TB, NC),                                # C axis last
            in_specs=[
                pl.BlockSpec(memory_space=pltpu.SMEM),                # weights
                pl.BlockSpec((2, HWp), lambda b, c: (0, 0)),          # row/col
                pl.BlockSpec((TB, CK, HWp), lambda b, c: (b, c, 0)),  # x slab
            ],
            out_specs=pl.BlockSpec((1, TB, HWp), lambda b, c: (b, 0, 0)),
            scratch_shapes=[
                pltpu.VMEM((TB, HWp), jnp.float32),   # running channel sum
                pltpu.VMEM((TB, HWp), jnp.float32),   # running channel max
            ]),
        compiler_params=pltpu.CompilerParams(
            dimension_semantics=("parallel", "arbitrary"),
            vmem_limit_bytes=vmem_limit),
    )(w_flat, rowcol, x_flat)

    out = out.reshape(B, HWp)
    if HWp != HW:
        out = out[:, :HW]
    return out.reshape(B, 1, H, W)


def spatial_attention_ref(x, weight, kernel_size=7):
    """Pure-JAX reference (matches the PyTorch module)."""
    pad = 3 if kernel_size == 7 else 1
    avg = jnp.mean(x, axis=1, keepdims=True)
    mx = jnp.max(x, axis=1, keepdims=True)
    cat = jnp.concatenate([avg, mx], axis=1)                 # (B, 2, H, W)
    y = lax.conv_general_dilated(
        cat, weight, window_strides=(1, 1),
        padding=[(pad, pad), (pad, pad)],
        dimension_numbers=("NCHW", "OIHW", "NCHW"))
    return jax.nn.sigmoid(y)


if __name__ == "__main__":
    key = jax.random.PRNGKey(0)
    kx, kw = jax.random.split(key)

    B, C, H, W = 2, 4, 16, 16
    K = 7
    x = jax.random.normal(kx, (B, C, H, W), dtype=jnp.float32)
    # Conv2d(2, 1, 7, bias=False)-shaped weight, deterministic init.
    weight = jax.random.normal(kw, (1, 2, K, K), dtype=jnp.float32) * 0.1

    out = spatial_attention(x, weight, kernel_size=K)
    out = jax.block_until_ready(out)

    ref = spatial_attention_ref(x, weight, kernel_size=K)
    assert out.shape == (B, 1, H, W)
    assert jnp.allclose(out, ref, atol=1e-5, rtol=1e-5), "mismatch vs reference"

    print("KERNEL_OK")
</pallas_src>

<mosaic_0001>
module attributes {stable_mosaic.version = 11 : i64} {
  func.func @_spatial_attention_kernel(%arg0: i32, %arg1: i32, %arg2: memref<98xf32, #tpu.memory_space<smem>>, %arg3: memref<2x256xi32, #tpu.memory_space<vmem>>, %arg4: memref<1x4x256xf32, #tpu.memory_space<vmem>>, %arg5: memref<1x1x256xf32, #tpu.memory_space<vmem>>, %arg6: memref<1x256xf32, #tpu.memory_space<vmem>>, %arg7: memref<1x256xf32, #tpu.memory_space<vmem>>) attributes {dimension_semantics = [#tpu.dimension_semantics<parallel>, #tpu.dimension_semantics<arbitrary>], iteration_bounds = array<i64: 2, 1>, scalar_prefetch = 0 : i64, scratch_operands = 2 : i64, tpu.core_type = #tpu.core_type<tc>, window_params = [{transform_indices = @transform_0, window_bounds = array<i64: 98>}, {pipeline_mode = #tpu.pipeline_mode<synchronous>, transform_indices = @transform_1, window_bounds = array<i64: 2, 256>}, {transform_indices = @transform_2, window_bounds = array<i64: 1, 4, 256>}, {transform_indices = @transform_3, window_bounds = array<i64: 1, 1, 256>}]} {
    %c0_i32 = arith.constant 0 : i32
    %0 = arith.cmpi eq, %arg1, %c0_i32 : i32
    %1 = arith.extui %0 : i1 to i32
    %c0_i32_0 = arith.constant 0 : i32
    %2 = arith.cmpi ne, %1, %c0_i32_0 : i32
    scf.if %2 {
      %cst_14 = arith.constant 0.000000e+00 : f32
      %15 = vector.broadcast %cst_14 : f32 to vector<1x256xf32>
      %c0_15 = arith.constant 0 : index
      %c0_16 = arith.constant 0 : index
      %16 = vector.load %arg6[%c0_15, %c0_16] : memref<1x256xf32, #tpu.memory_space<vmem>>, vector<1x256xf32>
      tpu.vector_store %arg6[%c0_15, %c0_16], %15 {strides = array<i32>} : memref<1x256xf32, #tpu.memory_space<vmem>>, vector<1x256xf32>,
      %cst_17 = arith.constant 0xFF800000 : f32
      %17 = vector.broadcast %cst_17 : f32 to vector<1x256xf32>
      %c0_18 = arith.constant 0 : index
      %c0_19 = arith.constant 0 : index
      %18 = vector.load %arg7[%c0_18, %c0_19] : memref<1x256xf32, #tpu.memory_space<vmem>>, vector<1x256xf32>
      tpu.vector_store %arg7[%c0_18, %c0_19], %17 {strides = array<i32>} : memref<1x256xf32, #tpu.memory_space<vmem>>, vector<1x256xf32>,
    } else {
    }
    %c0 = arith.constant 0 : index
    %c0_1 = arith.constant 0 : index
    %c0_2 = arith.constant 0 : index
    %3 = vector.load %arg4[%c0, %c0_1, %c0_2] : memref<1x4x256xf32, #tpu.memory_space<vmem>>, vector<1x4x256xf32>
    %cst = arith.constant dense<0.000000e+00> : vector<1x256xf32>
    %4 = vector.multi_reduction <add>, %3, %cst [1] : vector<1x4x256xf32> to vector<1x256xf32>
    %cst_3 = arith.constant dense<0xFF800000> : vector<1x256xf32>
    %5 = vector.multi_reduction <maximumf>, %3, %cst_3 [1] : vector<1x4x256xf32> to vector<1x256xf32>
    %c0_4 = arith.constant 0 : index
    %c0_5 = arith.constant 0 : index
    %6 = vector.load %arg6[%c0_4, %c0_5] : memref<1x256xf32, #tpu.memory_space<vmem>>, vector<1x256xf32>
    %7 = arith.addf %6, %4 : vector<1x256xf32>
    %c0_6 = arith.constant 0 : index
    %c0_7 = arith.constant 0 : index
    %8 = vector.load %arg6[%c0_6, %c0_7] : memref<1x256xf32, #tpu.memory_space<vmem>>, vector<1x256xf32>
    tpu.vector_store %arg6[%c0_6, %c0_7], %7 {strides = array<i32>} : memref<1x256xf32, #tpu.memory_space<vmem>>, vector<1x256xf32>,
    %c0_8 = arith.constant 0 : index
    %c0_9 = arith.constant 0 : index
    %9 = vector.load %arg7[%c0_8, %c0_9] : memref<1x256xf32, #tpu.memory_space<vmem>>, vector<1x256xf32>
    %10 = arith.maximumf %9, %5 : vector<1x256xf32>
    %c0_10 = arith.constant 0 : index
    %c0_11 = arith.constant 0 : index
    %11 = vector.load %arg7[%c0_10, %c0_11] : memref<1x256xf32, #tpu.memory_space<vmem>>, vector<1x256xf32>
    tpu.vector_store %arg7[%c0_10, %c0_11], %10 {strides = array<i32>} : memref<1x256xf32, #tpu.memory_space<vmem>>, vector<1x256xf32>,
    %c0_i32_12 = arith.constant 0 : i32
    %12 = arith.cmpi eq, %arg1, %c0_i32_12 : i32
    %13 = arith.extui %12 : i1 to i32
    %c0_i32_13 = arith.constant 0 : i32
    %14 = arith.cmpi ne, %13, %c0_i32_13 : i32
    scf.if %14 {
      %c0_14 = arith.constant 0 : index
      %c0_15 = arith.constant 0 : index
      %15 = vector.load %arg6[%c0_14, %c0_15] : memref<1x256xf32, #tpu.memory_space<vmem>>, vector<1x256xf32>
      %cst_16 = arith.constant 2.500000e-01 : f32
      %16 = vector.broadcast %cst_16 : f32 to vector<1x256xf32>
      %17 = arith.mulf %15, %16 : vector<1x256xf32>
      %c0_17 = arith.constant 0 : index
      %c0_18 = arith.constant 0 : index
      %18 = vector.load %arg7[%c0_17, %c0_18] : memref<1x256xf32, #tpu.memory_space<vmem>>, vector<1x256xf32>
      %c0_19 = arith.constant 0 : index
      %19 = memref.load %arg2[%c0_19] : memref<98xf32, #tpu.memory_space<smem>>
      %c1 = arith.constant 1 : index
      %20 = memref.load %arg2[%c1] : memref<98xf32, #tpu.memory_space<smem>>
      %c2 = arith.constant 2 : index
      %21 = memref.load %arg2[%c2] : memref<98xf32, #tpu.memory_space<smem>>
      %c3 = arith.constant 3 : index
      %22 = memref.load %arg2[%c3] : memref<98xf32, #tpu.memory_space<smem>>
      %c4 = arith.constant 4 : index
      %23 = memref.load %arg2[%c4] : memref<98xf32, #tpu.memory_space<smem>>
      %c5 = arith.constant 5 : index
      %24 = memref.load %arg2[%c5] : memref<98xf32, #tpu.memory_space<smem>>
      %c6 = arith.constant 6 : index
      %25 = memref.load %arg2[%c6] : memref<98xf32, #tpu.memory_space<smem>>
      %c7 = arith.constant 7 : index
      %26 = memref.load %arg2[%c7] : memref<98xf32, #tpu.memory_space<smem>>
      %c8 = arith.constant 8 : index
      %27 = memref.load %arg2[%c8] : memref<98xf32, #tpu.memory_space<smem>>
      %c9 = arith.constant 9 : index
      %28 = memref.load %arg2[%c9] : memref<98xf32, #tpu.memory_space<smem>>
      %c10 = arith.constant 10 : index
      %29 = memref.load %arg2[%c10] : memref<98xf32, #tpu.memory_space<smem>>
      %c11 = arith.constant 11 : index
      %30 = memref.load %arg2[%c11] : memref<98xf32, #tpu.memory_space<smem>>
      %c12 = arith.constant 12 : index
      %31 = memref.load %arg2[%c12] : memref<98xf32, #tpu.memory_space<smem>>
      %c13 = arith.constant 13 : index
      %32 = memref.load %arg2[%c13] : memref<98xf32, #tpu.memory_space<smem>>
      %c14 = arith.constant 14 : index
      %33 = memref.load %arg2[%c14] : memref<98xf32, #tpu.memory_space<smem>>
      %c15 = arith.constant 15 : index
      %34 = memref.load %arg2[%c15] : memref<98xf32, #tpu.memory_space<smem>>
      %c16 = arith.constant 16 : index
      %35 = memref.load %arg2[%c16] : memref<98xf32, #tpu.memory_space<smem>>
      %c17 = arith.constant 17 : index
      %36 = memref.load %arg2[%c17] : memref<98xf32, #tpu.memory_space<smem>>
      %c18 = arith.constant 18 : index
      %37 = memref.load %arg2[%c18] : memref<98xf32, #tpu.memory_space<smem>>
      %c19 = arith.constant 19 : index
      %38 = memref.load %arg2[%c19] : memref<98xf32, #tpu.memory_space<smem>>
      %c20 = arith.constant 20 : index
      %39 = memref.load %arg2[%c20] : memref<98xf32, #tpu.memory_space<smem>>
      %c21 = arith.constant 21 : index
      %40 = memref.load %arg2[%c21] : memref<98xf32, #tpu.memory_space<smem>>
      %c22 = arith.constant 22 : index
      %41 = memref.load %arg2[%c22] : memref<98xf32, #tpu.memory_space<smem>>
      %c23 = arith.constant 23 : index
      %42 = memref.load %arg2[%c23] : memref<98xf32, #tpu.memory_space<smem>>
      %c24 = arith.constant 24 : index
      %43 = memref.load %arg2[%c24] : memref<98xf32, #tpu.memory_space<smem>>
      %c25 = arith.constant 25 : index
      %44 = memref.load %arg2[%c25] : memref<98xf32, #tpu.memory_space<smem>>
      %c26 = arith.constant 26 : index
      %45 = memref.load %arg2[%c26] : memref<98xf32, #tpu.memory_space<smem>>
      %c27 = arith.constant 27 : index
      %46 = memref.load %arg2[%c27] : memref<98xf32, #tpu.memory_space<smem>>
      %c28 = arith.constant 28 : index
      %47 = memref.load %arg2[%c28] : memref<98xf32, #tpu.memory_space<smem>>
      %c29 = arith.constant 29 : index
      %48 = memref.load %arg2[%c29] : memref<98xf32, #tpu.memory_space<smem>>
      %c30 = arith.constant 30 : index
      %49 = memref.load %arg2[%c30] : memref<98xf32, #tpu.memory_space<smem>>
      %c31 = arith.constant 31 : index
      %50 = memref.load %arg2[%c31] : memref<98xf32, #tpu.memory_space<smem>>
      %c32 = arith.constant 32 : index
      %51 = memref.load %arg2[%c32] : memref<98xf32, #tpu.memory_space<smem>>
      %c33 = arith.constant 33 : index
      %52 = memref.load %arg2[%c33] : memref<98xf32, #tpu.memory_space<smem>>
      %c34 = arith.constant 34 : index
      %53 = memref.load %arg2[%c34] : memref<98xf32, #tpu.memory_space<smem>>
      %c35 = arith.constant 35 : index
      %54 = memref.load %arg2[%c35] : memref<98xf32, #tpu.memory_space<smem>>
      %c36 = arith.constant 36 : index
      %55 = memref.load %arg2[%c36] : memref<98xf32, #tpu.memory_space<smem>>
      %c37 = arith.constant 37 : index
      %56 = memref.load %arg2[%c37] : memref<98xf32, #tpu.memory_space<smem>>
      %c38 = arith.constant 38 : index
      %57 = memref.load %arg2[%c38] : memref<98xf32, #tpu.memory_space<smem>>
      %c39 = arith.constant 39 : index
      %58 = memref.load %arg2[%c39] : memref<98xf32, #tpu.memory_space<smem>>
      %c40 = arith.constant 40 : index
      %59 = memref.load %arg2[%c40] : memref<98xf32, #tpu.memory_space<smem>>
      %c41 = arith.constant 41 : index
      %60 = memref.load %arg2[%c41] : memref<98xf32, #tpu.memory_space<smem>>
      %c42 = arith.constant 42 : index
      %61 = memref.load %arg2[%c42] : memref<98xf32, #tpu.memory_space<smem>>
      %c43 = arith.constant 43 : index
      %62 = memref.load %arg2[%c43] : memref<98xf32, #tpu.memory_space<smem>>
      %c44 = arith.constant 44 : index
      %63 = memref.load %arg2[%c44] : memref<98xf32, #tpu.memory_space<smem>>
      %c45 = arith.constant 45 : index
      %64 = memref.load %arg2[%c45] : memref<98xf32, #tpu.memory_space<smem>>
      %c46 = arith.constant 46 : index
      %65 = memref.load %arg2[%c46] : memref<98xf32, #tpu.memory_space<smem>>
      %c47 = arith.constant 47 : index
      %66 = memref.load %arg2[%c47] : memref<98xf32, #tpu.memory_space<smem>>
      %c48 = arith.constant 48 : index
      %67 = memref.load %arg2[%c48] : memref<98xf32, #tpu.memory_space<smem>>
      %c49 = arith.constant 49 : index
      %68 = memref.load %arg2[%c49] : memref<98xf32, #tpu.memory_space<smem>>
      %c50 = arith.constant 50 : index
      %69 = memref.load %arg2[%c50] : memref<98xf32, #tpu.memory_space<smem>>
      %c51 = arith.constant 51 : index
      %70 = memref.load %arg2[%c51] : memref<98xf32, #tpu.memory_space<smem>>
      %c52 = arith.constant 52 : index
      %71 = memref.load %arg2[%c52] : memref<98xf32, #tpu.memory_space<smem>>
      %c53 = arith.constant 53 : index
      %72 = memref.load %arg2[%c53] : memref<98xf32, #tpu.memory_space<smem>>
      %c54 = arith.constant 54 : index
      %73 = memref.load %arg2[%c54] : memref<98xf32, #tpu.memory_space<smem>>
      %c55 = arith.constant 55 : index
      %74 = memref.load %arg2[%c55] : memref<98xf32, #tpu.memory_space<smem>>
      %c56 = arith.constant 56 : index
      %75 = memref.load %arg2[%c56] : memref<98xf32, #tpu.memory_space<smem>>
      %c57 = arith.constant 57 : index
      %76 = memref.load %arg2[%c57] : memref<98xf32, #tpu.memory_space<smem>>
      %c58 = arith.constant 58 : index
      %77 = memref.load %arg2[%c58] : memref<98xf32, #tpu.memory_space<smem>>
      %c59 = arith.constant 59 : index
      %78 = memref.load %arg2[%c59] : memref<98xf32, #tpu.memory_space<smem>>
      %c60 = arith.constant 60 : index
      %79 = memref.load %arg2[%c60] : memref<98xf32, #tpu.memory_space<smem>>
      %c61 = arith.constant 61 : index
      %80 = memref.load %arg2[%c61] : memref<98xf32, #tpu.memory_space<smem>>
      %c62 = arith.constant 62 : index
      %81 = memref.load %arg2[%c62] : memref<98xf32, #tpu.memory_space<smem>>
      %c63 = arith.constant 63 : index
      %82 = memref.load %arg2[%c63] : memref<98xf32, #tpu.memory_space<smem>>
      %c64 = arith.constant 64 : index
      %83 = memref.load %arg2[%c64] : memref<98xf32, #tpu.memory_space<smem>>
      %c65 = arith.constant 65 : index
      %84 = memref.load %arg2[%c65] : memref<98xf32, #tpu.memory_space<smem>>
      %c66 = arith.constant 66 : index
      %85 = memref.load %arg2[%c66] : memref<98xf32, #tpu.memory_space<smem>>
      %c67 = arith.constant 67 : index
      %86 = memref.load %arg2[%c67] : memref<98xf32, #tpu.memory_space<smem>>
      %c68 = arith.constant 68 : index
      %87 = memref.load %arg2[%c68] : memref<98xf32, #tpu.memory_space<smem>>
      %c69 = arith.constant 69 : index
      %88 = memref.load %arg2[%c69] : memref<98xf32, #tpu.memory_space<smem>>
      %c70 = arith.constant 70 : index
      %89 = memref.load %arg2[%c70] : memref<98xf32, #tpu.memory_space<smem>>
      %c71 = arith.constant 71 : index
      %90 = memref.load %arg2[%c71] : memref<98xf32, #tpu.memory_space<smem>>
      %c72 = arith.constant 72 : index
      %91 = memref.load %arg2[%c72] : memref<98xf32, #tpu.memory_space<smem>>
      %c73 = arith.constant 73 : index
      %92 = memref.load %arg2[%c73] : memref<98xf32, #tpu.memory_space<smem>>
      %c74 = arith.constant 74 : index
      %93 = memref.load %arg2[%c74] : memref<98xf32, #tpu.memory_space<smem>>
      %c75 = arith.constant 75 : index
      %94 = memref.load %arg2[%c75] : memref<98xf32, #tpu.memory_space<smem>>
      %c76 = arith.constant 76 : index
      %95 = memref.load %arg2[%c76] : memref<98xf32, #tpu.memory_space<smem>>
      %c77 = arith.constant 77 : index
      %96 = memref.load %arg2[%c77] : memref<98xf32, #tpu.memory_space<smem>>
      %c78 = arith.constant 78 : index
      %97 = memref.load %arg2[%c78] : memref<98xf32, #tpu.memory_space<smem>>
      %c79 = arith.constant 79 : index
      %98 = memref.load %arg2[%c79] : memref<98xf32, #tpu.memory_space<smem>>
      %c80 = arith.constant 80 : index
      %99 = memref.load %arg2[%c80] : memref<98xf32, #tpu.memory_space<smem>>
      %c81 = arith.constant 81 : index
      %100 = memref.load %arg2[%c81] : memref<98xf32, #tpu.memory_space<smem>>
      %c82 = arith.constant 82 : index
      %101 = memref.load %arg2[%c82] : memref<98xf32, #tpu.memory_space<smem>>
      %c83 = arith.constant 83 : index
      %102 = memref.load %arg2[%c83] : memref<98xf32, #tpu.memory_space<smem>>
      %c84 = arith.constant 84 : index
      %103 = memref.load %arg2[%c84] : memref<98xf32, #tpu.memory_space<smem>>
      %c85 = arith.constant 85 : index
      %104 = memref.load %arg2[%c85] : memref<98xf32, #tpu.memory_space<smem>>
      %c86 = arith.constant 86 : index
      %105 = memref.load %arg2[%c86] : memref<98xf32, #tpu.memory_space<smem>>
      %c87 = arith.constant 87 : index
      %106 = memref.load %arg2[%c87] : memref<98xf32, #tpu.memory_space<smem>>
      %c88 = arith.constant 88 : index
      %107 = memref.load %arg2[%c88] : memref<98xf32, #tpu.memory_space<smem>>
      %c89 = arith.constant 89 : index
      %108 = memref.load %arg2[%c89] : memref<98xf32, #tpu.memory_space<smem>>
      %c90 = arith.constant 90 : index
      %109 = memref.load %arg2[%c90] : memref<98xf32, #tpu.memory_space<smem>>
      %c91 = arith.constant 91 : index
      %110 = memref.load %arg2[%c91] : memref<98xf32, #tpu.memory_space<smem>>
      %c92 = arith.constant 92 : index
      %111 = memref.load %arg2[%c92] : memref<98xf32, #tpu.memory_space<smem>>
      %c93 = arith.constant 93 : index
      %112 = memref.load %arg2[%c93] : memref<98xf32, #tpu.memory_space<smem>>
      %c94 = arith.constant 94 : index
      %113 = memref.load %arg2[%c94] : memref<98xf32, #tpu.memory_space<smem>>
      %c95 = arith.constant 95 : index
      %114 = memref.load %arg2[%c95] : memref<98xf32, #tpu.memory_space<smem>>
      %c96 = arith.constant 96 : index
      %115 = memref.load %arg2[%c96] : memref<98xf32, #tpu.memory_space<smem>>
      %c97 = arith.constant 97 : index
      %116 = memref.load %arg2[%c97] : memref<98xf32, #tpu.memory_space<smem>>
      %c0_20 = arith.constant 0 : index
      %c0_21 = arith.constant 0 : index
      %117 = vector.load %arg3[%c0_20, %c0_21] : memref<2x256xi32, #tpu.memory_space<vmem>>, vector<2x256xi32>
      %118 = vector.extract_strided_slice %117 {offsets = [0, 0], sizes = [1, 256], strides = [1, 1]} : vector<2x256xi32> to vector<1x256xi32>
      %119 = vector.extract_strided_slice %117 {offsets = [1, 0], sizes = [1, 256], strides = [1, 1]} : vector<2x256xi32> to vector<1x256xi32>
      %c-3_i32 = arith.constant -3 : i32
      %120 = vector.broadcast %c-3_i32 : i32 to vector<1x256xi32>
      %121 = arith.addi %119, %120 : vector<1x256xi32>
      %c0_i32_22 = arith.constant 0 : i32
      %122 = vector.broadcast %c0_i32_22 : i32 to vector<1x256xi32>
      %123 = arith.cmpi sge, %121, %122 : vector<1x256xi32>
      %c16_i32 = arith.constant 16 : i32
      %124 = vector.broadcast %c16_i32 : i32 to vector<1x256xi32>
      %125 = arith.cmpi slt, %121, %124 : vector<1x256xi32>
      %126 = arith.andi %123, %125 : vector<1x256xi1>
      %c-2_i32 = arith.constant -2 : i32
      %127 = vector.broadcast %c-2_i32 : i32 to vector<1x256xi32>
      %128 = arith.addi %119, %127 : vector<1x256xi32>
      %c0_i32_23 = arith.constant 0 : i32
      %129 = vector.broadcast %c0_i32_23 : i32 to vector<1x256xi32>
      %130 = arith.cmpi sge, %128, %129 : vector<1x256xi32>
      %c16_i32_24 = arith.constant 16 : i32
      %131 = vector.broadcast %c16_i32_24 : i32 to vector<1x256xi32>
      %132 = arith.cmpi slt, %128, %131 : vector<1x256xi32>
      %133 = arith.andi %130, %132 : vector<1x256xi1>
      %c-1_i32 = arith.constant -1 : i32
      %134 = vector.broadcast %c-1_i32 : i32 to vector<1x256xi32>
      %135 = arith.addi %119, %134 : vector<1x256xi32>
      %c0_i32_25 = arith.constant 0 : i32
      %136 = vector.broadcast %c0_i32_25 : i32 to vector<1x256xi32>
      %137 = arith.cmpi sge, %135, %136 : vector<1x256xi32>
      %c16_i32_26 = arith.constant 16 : i32
      %138 = vector.broadcast %c16_i32_26 : i32 to vector<1x256xi32>
      %139 = arith.cmpi slt, %135, %138 : vector<1x256xi32>
      %140 = arith.andi %137, %139 : vector<1x256xi1>
      %c1_i32 = arith.constant 1 : i32
      %141 = vector.broadcast %c1_i32 : i32 to vector<1x256xi32>
      %142 = arith.addi %119, %141 : vector<1x256xi32>
      %c0_i32_27 = arith.constant 0 : i32
      %143 = vector.broadcast %c0_i32_27 : i32 to vector<1x256xi32>
      %144 = arith.cmpi sge, %142, %143 : vector<1x256xi32>
      %c16_i32_28 = arith.constant 16 : i32
      %145 = vector.broadcast %c16_i32_28 : i32 to vector<1x256xi32>
      %146 = arith.cmpi slt, %142, %145 : vector<1x256xi32>
      %147 = arith.andi %144, %146 : vector<1x256xi1>
      %c2_i32 = arith.constant 2 : i32
      %148 = vector.broadcast %c2_i32 : i32 to vector<1x256xi32>
      %149 = arith.addi %119, %148 : vector<1x256xi32>
      %c0_i32_29 = arith.constant 0 : i32
      %150 = vector.broadcast %c0_i32_29 : i32 to vector<1x256xi32>
      %151 = arith.cmpi sge, %149, %150 : vector<1x256xi32>
      %c16_i32_30 = arith.constant 16 : i32
      %152 = vector.broadcast %c16_i32_30 : i32 to vector<1x256xi32>
      %153 = arith.cmpi slt, %149, %152 : vector<1x256xi32>
      %154 = arith.andi %151, %153 : vector<1x256xi1>
      %c3_i32 = arith.constant 3 : i32
      %155 = vector.broadcast %c3_i32 : i32 to vector<1x256xi32>
      %156 = arith.addi %119, %155 : vector<1x256xi32>
      %c0_i32_31 = arith.constant 0 : i32
      %157 = vector.broadcast %c0_i32_31 : i32 to vector<1x256xi32>
      %158 = arith.cmpi sge, %156, %157 : vector<1x256xi32>
      %c16_i32_32 = arith.constant 16 : i32
      %159 = vector.broadcast %c16_i32_32 : i32 to vector<1x256xi32>
      %160 = arith.cmpi slt, %156, %159 : vector<1x256xi32>
      %161 = arith.andi %158, %160 : vector<1x256xi1>
      %c-3_i32_33 = arith.constant -3 : i32
      %162 = vector.broadcast %c-3_i32_33 : i32 to vector<1x256xi32>
      %163 = arith.addi %118, %162 : vector<1x256xi32>
      %c0_i32_34 = arith.constant 0 : i32
      %164 = vector.broadcast %c0_i32_34 : i32 to vector<1x256xi32>
      %165 = arith.cmpi sge, %163, %164 : vector<1x256xi32>
      %c16_i32_35 = arith.constant 16 : i32
      %166 = vector.broadcast %c16_i32_35 : i32 to vector<1x256xi32>
      %167 = arith.cmpi slt, %163, %166 : vector<1x256xi32>
      %168 = arith.andi %165, %167 : vector<1x256xi1>
      %c-2_i32_36 = arith.constant -2 : i32
      %169 = vector.broadcast %c-2_i32_36 : i32 to vector<1x256xi32>
      %170 = arith.addi %118, %169 : vector<1x256xi32>
      %c0_i32_37 = arith.constant 0 : i32
      %171 = vector.broadcast %c0_i32_37 : i32 to vector<1x256xi32>
      %172 = arith.cmpi sge, %170, %171 : vector<1x256xi32>
      %c16_i32_38 = arith.constant 16 : i32
      %173 = vector.broadcast %c16_i32_38 : i32 to vector<1x256xi32>
      %174 = arith.cmpi slt, %170, %173 : vector<1x256xi32>
      %175 = arith.andi %172, %174 : vector<1x256xi1>
      %c-1_i32_39 = arith.constant -1 : i32
      %176 = vector.broadcast %c-1_i32_39 : i32 to vector<1x256xi32>
      %177 = arith.addi %118, %176 : vector<1x256xi32>
      %c0_i32_40 = arith.constant 0 : i32
      %178 = vector.broadcast %c0_i32_40 : i32 to vector<1x256xi32>
      %179 = arith.cmpi sge, %177, %178 : vector<1x256xi32>
      %c16_i32_41 = arith.constant 16 : i32
      %180 = vector.broadcast %c16_i32_41 : i32 to vector<1x256xi32>
      %181 = arith.cmpi slt, %177, %180 : vector<1x256xi32>
      %182 = arith.andi %179, %181 : vector<1x256xi1>
      %c1_i32_42 = arith.constant 1 : i32
      %183 = vector.broadcast %c1_i32_42 : i32 to vector<1x256xi32>
      %184 = arith.addi %118, %183 : vector<1x256xi32>
      %c0_i32_43 = arith.constant 0 : i32
      %185 = vector.broadcast %c0_i32_43 : i32 to vector<1x256xi32>
      %186 = arith.cmpi sge, %184, %185 : vector<1x256xi32>
      %c16_i32_44 = arith.constant 16 : i32
      %187 = vector.broadcast %c16_i32_44 : i32 to vector<1x256xi32>
      %188 = arith.cmpi slt, %184, %187 : vector<1x256xi32>
      %189 = arith.andi %186, %188 : vector<1x256xi1>
      %c2_i32_45 = arith.constant 2 : i32
      %190 = vector.broadcast %c2_i32_45 : i32 to vector<1x256xi32>
      %191 = arith.addi %118, %190 : vector<1x256xi32>
      %c0_i32_46 = arith.constant 0 : i32
      %192 = vector.broadcast %c0_i32_46 : i32 to vector<1x256xi32>
      %193 = arith.cmpi sge, %191, %192 : vector<1x256xi32>
      %c16_i32_47 = arith.constant 16 : i32
      %194 = vector.broadcast %c16_i32_47 : i32 to vector<1x256xi32>
      %195 = arith.cmpi slt, %191, %194 : vector<1x256xi32>
      %196 = arith.andi %193, %195 : vector<1x256xi1>
      %c3_i32_48 = arith.constant 3 : i32
      %197 = vector.broadcast %c3_i32_48 : i32 to vector<1x256xi32>
      %198 = arith.addi %118, %197 : vector<1x256xi32>
      %c0_i32_49 = arith.constant 0 : i32
      %199 = vector.broadcast %c0_i32_49 : i32 to vector<1x256xi32>
      %200 = arith.cmpi sge, %198, %199 : vector<1x256xi32>
      %c16_i32_50 = arith.constant 16 : i32
      %201 = vector.broadcast %c16_i32_50 : i32 to vector<1x256xi32>
      %202 = arith.cmpi slt, %198, %201 : vector<1x256xi32>
      %203 = arith.andi %200, %202 : vector<1x256xi1>
      %c3_i32_51 = arith.constant 3 : i32
      %204 = tpu.dynamic_rotate %17 by %c3_i32_51 dim 1 : vector<1x256xf32>, i32 -> vector<1x256xf32>
      %cst_52 = arith.constant 0.000000e+00 : f32
      %205 = vector.broadcast %cst_52 : f32 to vector<1x256xf32>
      %206 = arith.select %126, %204, %205 : vector<1x256xi1>, vector<1x256xf32>
      %c2_i32_53 = arith.constant 2 : i32
      %207 = tpu.dynamic_rotate %17 by %c2_i32_53 dim 1 : vector<1x256xf32>, i32 -> vector<1x256xf32>
      %cst_54 = arith.constant 0.000000e+00 : f32
      %208 = vector.broadcast %cst_54 : f32 to vector<1x256xf32>
      %209 = arith.select %133, %207, %208 : vector<1x256xi1>, vector<1x256xf32>
      %c1_i32_55 = arith.constant 1 : i32
      %210 = tpu.dynamic_rotate %17 by %c1_i32_55 dim 1 : vector<1x256xf32>, i32 -> vector<1x256xf32>
      %cst_56 = arith.constant 0.000000e+00 : f32
      %211 = vector.broadcast %cst_56 : f32 to vector<1x256xf32>
      %212 = arith.select %140, %210, %211 : vector<1x256xi1>, vector<1x256xf32>
      %c255_i32 = arith.constant 255 : i32
      %213 = tpu.dynamic_rotate %17 by %c255_i32 dim 1 : vector<1x256xf32>, i32 -> vector<1x256xf32>
      %cst_57 = arith.constant 0.000000e+00 : f32
      %214 = vector.broadcast %cst_57 : f32 to vector<1x256xf32>
      %215 = arith.select %147, %213, %214 : vector<1x256xi1>, vector<1x256xf32>
      %c254_i32 = arith.constant 254 : i32
      %216 = tpu.dynamic_rotate %17 by %c254_i32 dim 1 : vector<1x256xf32>, i32 -> vector<1x256xf32>
      %cst_58 = arith.constant 0.000000e+00 : f32
      %217 = vector.broadcast %cst_58 : f32 to vector<1x256xf32>
      %218 = arith.select %154, %216, %217 : vector<1x256xi1>, vector<1x256xf32>
      %c253_i32 = arith.constant 253 : i32
      %219 = tpu.dynamic_rotate %17 by %c253_i32 dim 1 : vector<1x256xf32>, i32 -> vector<1x256xf32>
      %cst_59 = arith.constant 0.000000e+00 : f32
      %220 = vector.broadcast %cst_59 : f32 to vector<1x256xf32>
      %221 = arith.select %161, %219, %220 : vector<1x256xi1>, vector<1x256xf32>
      %c3_i32_60 = arith.constant 3 : i32
      %222 = tpu.dynamic_rotate %18 by %c3_i32_60 dim 1 : vector<1x256xf32>, i32 -> vector<1x256xf32>
      %cst_61 = arith.constant 0.000000e+00 : f32
      %223 = vector.broadcast %cst_61 : f32 to vector<1x256xf32>
      %224 = arith.select %126, %222, %223 : vector<1x256xi1>, vector<1x256xf32>
      %c2_i32_62 = arith.constant 2 : i32
      %225 = tpu.dynamic_rotate %18 by %c2_i32_62 dim 1 : vector<1x256xf32>, i32 -> vector<1x256xf32>
      %cst_63 = arith.constant 0.000000e+00 : f32
      %226 = vector.broadcast %cst_63 : f32 to vector<1x256xf32>
      %227 = arith.select %133, %225, %226 : vector<1x256xi1>, vector<1x256xf32>
      %c1_i32_64 = arith.constant 1 : i32
      %228 = tpu.dynamic_rotate %18 by %c1_i32_64 dim 1 : vector<1x256xf32>, i32 -> vector<1x256xf32>
      %cst_65 = arith.constant 0.000000e+00 : f32
      %229 = vector.broadcast %cst_65 : f32 to vector<1x256xf32>
      %230 = arith.select %140, %228, %229 : vector<1x256xi1>, vector<1x256xf32>
      %c255_i32_66 = arith.constant 255 : i32
      %231 = tpu.dynamic_rotate %18 by %c255_i32_66 dim 1 : vector<1x256xf32>, i32 -> vector<1x256xf32>
      %cst_67 = arith.constant 0.000000e+00 : f32
      %232 = vector.broadcast %cst_67 : f32 to vector<1x256xf32>
      %233 = arith.select %147, %231, %232 : vector<1x256xi1>, vector<1x256xf32>
      %c254_i32_68 = arith.constant 254 : i32
      %234 = tpu.dynamic_rotate %18 by %c254_i32_68 dim 1 : vector<1x256xf32>, i32 -> vector<1x256xf32>
      %cst_69 = arith.constant 0.000000e+00 : f32
      %235 = vector.broadcast %cst_69 : f32 to vector<1x256xf32>
      %236 = arith.select %154, %234, %235 : vector<1x256xi1>, vector<1x256xf32>
      %c253_i32_70 = arith.constant 253 : i32
      %237 = tpu.dynamic_rotate %18 by %c253_i32_70 dim 1 : vector<1x256xf32>, i32 -> vector<1x256xf32>
      %cst_71 = arith.constant 0.000000e+00 : f32
      %238 = vector.broadcast %cst_71 : f32 to vector<1x256xf32>
      %239 = arith.select %161, %237, %238 : vector<1x256xi1>, vector<1x256xf32>
      %240 = vector.broadcast %19 : f32 to vector<1x256xf32>
      %241 = arith.mulf %206, %240 : vector<1x256xf32>
      %242 = vector.broadcast %20 : f32 to vector<1x256xf32>
      %243 = arith.mulf %209, %242 : vector<1x256xf32>
      %244 = arith.addf %241, %243 : vector<1x256xf32>
      %245 = vector.broadcast %21 : f32 to vector<1x256xf32>
      %246 = arith.mulf %212, %245 : vector<1x256xf32>
      %247 = arith.addf %244, %246 : vector<1x256xf32>
      %248 = vector.broadcast %22 : f32 to vector<1x256xf32>
      %249 = arith.mulf %17, %248 : vector<1x256xf32>
      %250 = arith.addf %247, %249 : vector<1x256xf32>
      %251 = vector.broadcast %23 : f32 to vector<1x256xf32>
      %252 = arith.mulf %215, %251 : vector<1x256xf32>
      %253 = arith.addf %250, %252 : vector<1x256xf32>
      %254 = vector.broadcast %24 : f32 to vector<1x256xf32>
      %255 = arith.mulf %218, %254 : vector<1x256xf32>
      %256 = arith.addf %253, %255 : vector<1x256xf32>
      %257 = vector.broadcast %25 : f32 to vector<1x256xf32>
      %258 = arith.mulf %221, %257 : vector<1x256xf32>
      %259 = arith.addf %256, %258 : vector<1x256xf32>
      %260 = vector.broadcast %68 : f32 to vector<1x256xf32>
      %261 = arith.mulf %224, %260 : vector<1x256xf32>
      %262 = arith.addf %259, %261 : vector<1x256xf32>
      %263 = vector.broadcast %69 : f32 to vector<1x256xf32>
      %264 = arith.mulf %227, %263 : vector<1x256xf32>
      %265 = arith.addf %262, %264 : vector<1x256xf32>
      %266 = vector.broadcast %70 : f32 to vector<1x256xf32>
      %267 = arith.mulf %230, %266 : vector<1x256xf32>
      %268 = arith.addf %265, %267 : vector<1x256xf32>
      %269 = vector.broadcast %71 : f32 to vector<1x256xf32>
      %270 = arith.mulf %18, %269 : vector<1x256xf32>
      %271 = arith.addf %268, %270 : vector<1x256xf32>
      %272 = vector.broadcast %72 : f32 to vector<1x256xf32>
      %273 = arith.mulf %233, %272 : vector<1x256xf32>
      %274 = arith.addf %271, %273 : vector<1x256xf32>
      %275 = vector.broadcast %73 : f32 to vector<1x256xf32>
      %276 = arith.mulf %236, %275 : vector<1x256xf32>
      %277 = arith.addf %274, %276 : vector<1x256xf32>
      %278 = vector.broadcast %74 : f32 to vector<1x256xf32>
      %279 = arith.mulf %239, %278 : vector<1x256xf32>
      %280 = arith.addf %277, %279 : vector<1x256xf32>
      %c48_i32 = arith.constant 48 : i32
      %281 = tpu.dynamic_rotate %280 by %c48_i32 dim 1 : vector<1x256xf32>, i32 -> vector<1x256xf32>
      %cst_72 = arith.constant 0.000000e+00 : f32
      %282 = vector.broadcast %cst_72 : f32 to vector<1x256xf32>
      %283 = arith.select %168, %281, %282 : vector<1x256xi1>, vector<1x256xf32>
      %284 = vector.broadcast %26 : f32 to vector<1x256xf32>
      %285 = arith.mulf %206, %284 : vector<1x256xf32>
      %286 = vector.broadcast %27 : f32 to vector<1x256xf32>
      %287 = arith.mulf %209, %286 : vector<1x256xf32>
      %288 = arith.addf %285, %287 : vector<1x256xf32>
      %289 = vector.broadcast %28 : f32 to vector<1x256xf32>
      %290 = arith.mulf %212, %289 : vector<1x256xf32>
      %291 = arith.addf %288, %290 : vector<1x256xf32>
      %292 = vector.broadcast %29 : f32 to vector<1x256xf32>
      %293 = arith.mulf %17, %292 : vector<1x256xf32>
      %294 = arith.addf %291, %293 : vector<1x256xf32>
      %295 = vector.broadcast %30 : f32 to vector<1x256xf32>
      %296 = arith.mulf %215, %295 : vector<1x256xf32>
      %297 = arith.addf %294, %296 : vector<1x256xf32>
      %298 = vector.broadcast %31 : f32 to vector<1x256xf32>
      %299 = arith.mulf %218, %298 : vector<1x256xf32>
      %300 = arith.addf %297, %299 : vector<1x256xf32>
      %301 = vector.broadcast %32 : f32 to vector<1x256xf32>
      %302 = arith.mulf %221, %301 : vector<1x256xf32>
      %303 = arith.addf %300, %302 : vector<1x256xf32>
      %304 = vector.broadcast %75 : f32 to vector<1x256xf32>
      %305 = arith.mulf %224, %304 : vector<1x256xf32>
      %306 = arith.addf %303, %305 : vector<1x256xf32>
      %307 = vector.broadcast %76 : f32 to vector<1x256xf32>
      %308 = arith.mulf %227, %307 : vector<1x256xf32>
      %309 = arith.addf %306, %308 : vector<1x256xf32>
      %310 = vector.broadcast %77 : f32 to vector<1x256xf32>
      %311 = arith.mulf %230, %310 : vector<1x256xf32>
      %312 = arith.addf %309, %311 : vector<1x256xf32>
      %313 = vector.broadcast %78 : f32 to vector<1x256xf32>
      %314 = arith.mulf %18, %313 : vector<1x256xf32>
      %315 = arith.addf %312, %314 : vector<1x256xf32>
      %316 = vector.broadcast %79 : f32 to vector<1x256xf32>
      %317 = arith.mulf %233, %316 : vector<1x256xf32>
      %318 = arith.addf %315, %317 : vector<1x256xf32>
      %319 = vector.broadcast %80 : f32 to vector<1x256xf32>
      %320 = arith.mulf %236, %319 : vector<1x256xf32>
      %321 = arith.addf %318, %320 : vector<1x256xf32>
      %322 = vector.broadcast %81 : f32 to vector<1x256xf32>
      %323 = arith.mulf %239, %322 : vector<1x256xf32>
      %324 = arith.addf %321, %323 : vector<1x256xf32>
      %c32_i32 = arith.constant 32 : i32
      %325 = tpu.dynamic_rotate %324 by %c32_i32 dim 1 : vector<1x256xf32>, i32 -> vector<1x256xf32>
      %cst_73 = arith.constant 0.000000e+00 : f32
      %326 = vector.broadcast %cst_73 : f32 to vector<1x256xf32>
      %327 = arith.select %175, %325, %326 : vector<1x256xi1>, vector<1x256xf32>
      %328 = arith.addf %283, %327 : vector<1x256xf32>
      %329 = vector.broadcast %33 : f32 to vector<1x256xf32>
      %330 = arith.mulf %206, %329 : vector<1x256xf32>
      %331 = vector.broadcast %34 : f32 to vector<1x256xf32>
      %332 = arith.mulf %209, %331 : vector<1x256xf32>
      %333 = arith.addf %330, %332 : vector<1x256xf32>
      %334 = vector.broadcast %35 : f32 to vector<1x256xf32>
      %335 = arith.mulf %212, %334 : vector<1x256xf32>
      %336 = arith.addf %333, %335 : vector<1x256xf32>
      %337 = vector.broadcast %36 : f32 to vector<1x256xf32>
      %338 = arith.mulf %17, %337 : vector<1x256xf32>
      %339 = arith.addf %336, %338 : vector<1x256xf32>
      %340 = vector.broadcast %37 : f32 to vector<1x256xf32>
      %341 = arith.mulf %215, %340 : vector<1x256xf32>
      %342 = arith.addf %339, %341 : vector<1x256xf32>
      %343 = vector.broadcast %38 : f32 to vector<1x256xf32>
      %344 = arith.mulf %218, %343 : vector<1x256xf32>
      %345 = arith.addf %342, %344 : vector<1x256xf32>
      %346 = vector.broadcast %39 : f32 to vector<1x256xf32>
      %347 = arith.mulf %221, %346 : vector<1x256xf32>
      %348 = arith.addf %345, %347 : vector<1x256xf32>
      %349 = vector.broadcast %82 : f32 to vector<1x256xf32>
      %350 = arith.mulf %224, %349 : vector<1x256xf32>
      %351 = arith.addf %348, %350 : vector<1x256xf32>
      %352 = vector.broadcast %83 : f32 to vector<1x256xf32>
      %353 = arith.mulf %227, %352 : vector<1x256xf32>
      %354 = arith.addf %351, %353 : vector<1x256xf32>
      %355 = vector.broadcast %84 : f32 to vector<1x256xf32>
      %356 = arith.mulf %230, %355 : vector<1x256xf32>
      %357 = arith.addf %354, %356 : vector<1x256xf32>
      %358 = vector.broadcast %85 : f32 to vector<1x256xf32>
      %359 = arith.mulf %18, %358 : vector<1x256xf32>
      %360 = arith.addf %357, %359 : vector<1x256xf32>
      %361 = vector.broadcast %86 : f32 to vector<1x256xf32>
      %362 = arith.mulf %233, %361 : vector<1x256xf32>
      %363 = arith.addf %360, %362 : vector<1x256xf32>
      %364 = vector.broadcast %87 : f32 to vector<1x256xf32>
      %365 = arith.mulf %236, %364 : vector<1x256xf32>
      %366 = arith.addf %363, %365 : vector<1x256xf32>
      %367 = vector.broadcast %88 : f32 to vector<1x256xf32>
      %368 = arith.mulf %239, %367 : vector<1x256xf32>
      %369 = arith.addf %366, %368 : vector<1x256xf32>
      %c16_i32_74 = arith.constant 16 : i32
      %370 = tpu.dynamic_rotate %369 by %c16_i32_74 dim 1 : vector<1x256xf32>, i32 -> vector<1x256xf32>
      %cst_75 = arith.constant 0.000000e+00 : f32
      %371 = vector.broadcast %cst_75 : f32 to vector<1x256xf32>
      %372 = arith.select %182, %370, %371 : vector<1x256xi1>, vector<1x256xf32>
      %373 = arith.addf %328, %372 : vector<1x256xf32>
      %374 = vector.broadcast %40 : f32 to vector<1x256xf32>
      %375 = arith.mulf %206, %374 : vector<1x256xf32>
      %376 = vector.broadcast %41 : f32 to vector<1x256xf32>
      %377 = arith.mulf %209, %376 : vector<1x256xf32>
      %378 = arith.addf %375, %377 : vector<1x256xf32>
      %379 = vector.broadcast %42 : f32 to vector<1x256xf32>
      %380 = arith.mulf %212, %379 : vector<1x256xf32>
      %381 = arith.addf %378, %380 : vector<1x256xf32>
      %382 = vector.broadcast %43 : f32 to vector<1x256xf32>
      %383 = arith.mulf %17, %382 : vector<1x256xf32>
      %384 = arith.addf %381, %383 : vector<1x256xf32>
      %385 = vector.broadcast %44 : f32 to vector<1x256xf32>
      %386 = arith.mulf %215, %385 : vector<1x256xf32>
      %387 = arith.addf %384, %386 : vector<1x256xf32>
      %388 = vector.broadcast %45 : f32 to vector<1x256xf32>
      %389 = arith.mulf %218, %388 : vector<1x256xf32>
      %390 = arith.addf %387, %389 : vector<1x256xf32>
      %391 = vector.broadcast %46 : f32 to vector<1x256xf32>
      %392 = arith.mulf %221, %391 : vector<1x256xf32>
      %393 = arith.addf %390, %392 : vector<1x256xf32>
      %394 = vector.broadcast %89 : f32 to vector<1x256xf32>
      %395 = arith.mulf %224, %394 : vector<1x256xf32>
      %396 = arith.addf %393, %395 : vector<1x256xf32>
      %397 = vector.broadcast %90 : f32 to vector<1x256xf32>
      %398 = arith.mulf %227, %397 : vector<1x256xf32>
      %399 = arith.addf %396, %398 : vector<1x256xf32>
      %400 = vector.broadcast %91 : f32 to vector<1x256xf32>
      %401 = arith.mulf %230, %400 : vector<1x256xf32>
      %402 = arith.addf %399, %401 : vector<1x256xf32>
      %403 = vector.broadcast %92 : f32 to vector<1x256xf32>
      %404 = arith.mulf %18, %403 : vector<1x256xf32>
      %405 = arith.addf %402, %404 : vector<1x256xf32>
      %406 = vector.broadcast %93 : f32 to vector<1x256xf32>
      %407 = arith.mulf %233, %406 : vector<1x256xf32>
      %408 = arith.addf %405, %407 : vector<1x256xf32>
      %409 = vector.broadcast %94 : f32 to vector<1x256xf32>
      %410 = arith.mulf %236, %409 : vector<1x256xf32>
      %411 = arith.addf %408, %410 : vector<1x256xf32>
      %412 = vector.broadcast %95 : f32 to vector<1x256xf32>
      %413 = arith.mulf %239, %412 : vector<1x256xf32>
      %414 = arith.addf %411, %413 : vector<1x256xf32>
      %415 = arith.addf %373, %414 : vector<1x256xf32>
      %416 = vector.broadcast %47 : f32 to vector<1x256xf32>
      %417 = arith.mulf %206, %416 : vector<1x256xf32>
      %418 = vector.broadcast %48 : f32 to vector<1x256xf32>
      %419 = arith.mulf %209, %418 : vector<1x256xf32>
      %420 = arith.addf %417, %419 : vector<1x256xf32>
      %421 = vector.broadcast %49 : f32 to vector<1x256xf32>
      %422 = arith.mulf %212, %421 : vector<1x256xf32>
      %423 = arith.addf %420, %422 : vector<1x256xf32>
      %424 = vector.broadcast %50 : f32 to vector<1x256xf32>
      %425 = arith.mulf %17, %424 : vector<1x256xf32>
      %426 = arith.addf %423, %425 : vector<1x256xf32>
      %427 = vector.broadcast %51 : f32 to vector<1x256xf32>
      %428 = arith.mulf %215, %427 : vector<1x256xf32>
      %429 = arith.addf %426, %428 : vector<1x256xf32>
      %430 = vector.broadcast %52 : f32 to vector<1x256xf32>
      %431 = arith.mulf %218, %430 : vector<1x256xf32>
      %432 = arith.addf %429, %431 : vector<1x256xf32>
      %433 = vector.broadcast %53 : f32 to vector<1x256xf32>
      %434 = arith.mulf %221, %433 : vector<1x256xf32>
      %435 = arith.addf %432, %434 : vector<1x256xf32>
      %436 = vector.broadcast %96 : f32 to vector<1x256xf32>
      %437 = arith.mulf %224, %436 : vector<1x256xf32>
      %438 = arith.addf %435, %437 : vector<1x256xf32>
      %439 = vector.broadcast %97 : f32 to vector<1x256xf32>
      %440 = arith.mulf %227, %439 : vector<1x256xf32>
      %441 = arith.addf %438, %440 : vector<1x256xf32>
      %442 = vector.broadcast %98 : f32 to vector<1x256xf32>
      %443 = arith.mulf %230, %442 : vector<1x256xf32>
      %444 = arith.addf %441, %443 : vector<1x256xf32>
      %445 = vector.broadcast %99 : f32 to vector<1x256xf32>
      %446 = arith.mulf %18, %445 : vector<1x256xf32>
      %447 = arith.addf %444, %446 : vector<1x256xf32>
      %448 = vector.broadcast %100 : f32 to vector<1x256xf32>
      %449 = arith.mulf %233, %448 : vector<1x256xf32>
      %450 = arith.addf %447, %449 : vector<1x256xf32>
      %451 = vector.broadcast %101 : f32 to vector<1x256xf32>
      %452 = arith.mulf %236, %451 : vector<1x256xf32>
      %453 = arith.addf %450, %452 : vector<1x256xf32>
      %454 = vector.broadcast %102 : f32 to vector<1x256xf32>
      %455 = arith.mulf %239, %454 : vector<1x256xf32>
      %456 = arith.addf %453, %455 : vector<1x256xf32>
      %c240_i32 = arith.constant 240 : i32
      %457 = tpu.dynamic_rotate %456 by %c240_i32 dim 1 : vector<1x256xf32>, i32 -> vector<1x256xf32>
      %cst_76 = arith.constant 0.000000e+00 : f32
      %458 = vector.broadcast %cst_76 : f32 to vector<1x256xf32>
      %459 = arith.select %189, %457, %458 : vector<1x256xi1>, vector<1x256xf32>
      %460 = arith.addf %415, %459 : vector<1x256xf32>
      %461 = vector.broadcast %54 : f32 to vector<1x256xf32>
      %462 = arith.mulf %206, %461 : vector<1x256xf32>
      %463 = vector.broadcast %55 : f32 to vector<1x256xf32>
      %464 = arith.mulf %209, %463 : vector<1x256xf32>
      %465 = arith.addf %462, %464 : vector<1x256xf32>
      %466 = vector.broadcast %56 : f32 to vector<1x256xf32>
      %467 = arith.mulf %212, %466 : vector<1x256xf32>
      %468 = arith.addf %465, %467 : vector<1x256xf32>
      %469 = vector.broadcast %57 : f32 to vector<1x256xf32>
      %470 = arith.mulf %17, %469 : vector<1x256xf32>
      %471 = arith.addf %468, %470 : vector<1x256xf32>
      %472 = vector.broadcast %58 : f32 to vector<1x256xf32>
      %473 = arith.mulf %215, %472 : vector<1x256xf32>
      %474 = arith.addf %471, %473 : vector<1x256xf32>
      %475 = vector.broadcast %59 : f32 to vector<1x256xf32>
      %476 = arith.mulf %218, %475 : vector<1x256xf32>
      %477 = arith.addf %474, %476 : vector<1x256xf32>
      %478 = vector.broadcast %60 : f32 to vector<1x256xf32>
      %479 = arith.mulf %221, %478 : vector<1x256xf32>
      %480 = arith.addf %477, %479 : vector<1x256xf32>
      %481 = vector.broadcast %103 : f32 to vector<1x256xf32>
      %482 = arith.mulf %224, %481 : vector<1x256xf32>
      %483 = arith.addf %480, %482 : vector<1x256xf32>
      %484 = vector.broadcast %104 : f32 to vector<1x256xf32>
      %485 = arith.mulf %227, %484 : vector<1x256xf32>
      %486 = arith.addf %483, %485 : vector<1x256xf32>
      %487 = vector.broadcast %105 : f32 to vector<1x256xf32>
      %488 = arith.mulf %230, %487 : vector<1x256xf32>
      %489 = arith.addf %486, %488 : vector<1x256xf32>
      %490 = vector.broadcast %106 : f32 to vector<1x256xf32>
      %491 = arith.mulf %18, %490 : vector<1x256xf32>
      %492 = arith.addf %489, %491 : vector<1x256xf32>
      %493 = vector.broadcast %107 : f32 to vector<1x256xf32>
      %494 = arith.mulf %233, %493 : vector<1x256xf32>
      %495 = arith.addf %492, %494 : vector<1x256xf32>
      %496 = vector.broadcast %108 : f32 to vector<1x256xf32>
      %497 = arith.mulf %236, %496 : vector<1x256xf32>
      %498 = arith.addf %495, %497 : vector<1x256xf32>
      %499 = vector.broadcast %109 : f32 to vector<1x256xf32>
      %500 = arith.mulf %239, %499 : vector<1x256xf32>
      %501 = arith.addf %498, %500 : vector<1x256xf32>
      %c224_i32 = arith.constant 224 : i32
      %502 = tpu.dynamic_rotate %501 by %c224_i32 dim 1 : vector<1x256xf32>, i32 -> vector<1x256xf32>
      %cst_77 = arith.constant 0.000000e+00 : f32
      %503 = vector.broadcast %cst_77 : f32 to vector<1x256xf32>
      %504 = arith.select %196, %502, %503 : vector<1x256xi1>, vector<1x256xf32>
      %505 = arith.addf %460, %504 : vector<1x256xf32>
      %506 = vector.broadcast %61 : f32 to vector<1x256xf32>
      %507 = arith.mulf %206, %506 : vector<1x256xf32>
      %508 = vector.broadcast %62 : f32 to vector<1x256xf32>
      %509 = arith.mulf %209, %508 : vector<1x256xf32>
      %510 = arith.addf %507, %509 : vector<1x256xf32>
      %511 = vector.broadcast %63 : f32 to vector<1x256xf32>
      %512 = arith.mulf %212, %511 : vector<1x256xf32>
      %513 = arith.addf %510, %512 : vector<1x256xf32>
      %514 = vector.broadcast %64 : f32 to vector<1x256xf32>
      %515 = arith.mulf %17, %514 : vector<1x256xf32>
      %516 = arith.addf %513, %515 : vector<1x256xf32>
      %517 = vector.broadcast %65 : f32 to vector<1x256xf32>
      %518 = arith.mulf %215, %517 : vector<1x256xf32>
      %519 = arith.addf %516, %518 : vector<1x256xf32>
      %520 = vector.broadcast %66 : f32 to vector<1x256xf32>
      %521 = arith.mulf %218, %520 : vector<1x256xf32>
      %522 = arith.addf %519, %521 : vector<1x256xf32>
      %523 = vector.broadcast %67 : f32 to vector<1x256xf32>
      %524 = arith.mulf %221, %523 : vector<1x256xf32>
      %525 = arith.addf %522, %524 : vector<1x256xf32>
      %526 = vector.broadcast %110 : f32 to vector<1x256xf32>
      %527 = arith.mulf %224, %526 : vector<1x256xf32>
      %528 = arith.addf %525, %527 : vector<1x256xf32>
      %529 = vector.broadcast %111 : f32 to vector<1x256xf32>
      %530 = arith.mulf %227, %529 : vector<1x256xf32>
      %531 = arith.addf %528, %530 : vector<1x256xf32>
      %532 = vector.broadcast %112 : f32 to vector<1x256xf32>
      %533 = arith.mulf %230, %532 : vector<1x256xf32>
      %534 = arith.addf %531, %533 : vector<1x256xf32>
      %535 = vector.broadcast %113 : f32 to vector<1x256xf32>
      %536 = arith.mulf %18, %535 : vector<1x256xf32>
      %537 = arith.addf %534, %536 : vector<1x256xf32>
      %538 = vector.broadcast %114 : f32 to vector<1x256xf32>
      %539 = arith.mulf %233, %538 : vector<1x256xf32>
      %540 = arith.addf %537, %539 : vector<1x256xf32>
      %541 = vector.broadcast %115 : f32 to vector<1x256xf32>
      %542 = arith.mulf %236, %541 : vector<1x256xf32>
      %543 = arith.addf %540, %542 : vector<1x256xf32>
      %544 = vector.broadcast %116 : f32 to vector<1x256xf32>
      %545 = arith.mulf %239, %544 : vector<1x256xf32>
      %546 = arith.addf %543, %545 : vector<1x256xf32>
      %c208_i32 = arith.constant 208 : i32
      %547 = tpu.dynamic_rotate %546 by %c208_i32 dim 1 : vector<1x256xf32>, i32 -> vector<1x256xf32>
      %cst_78 = arith.constant 0.000000e+00 : f32
      %548 = vector.broadcast %cst_78 : f32 to vector<1x256xf32>
      %549 = arith.select %203, %547, %548 : vector<1x256xi1>, vector<1x256xf32>
      %550 = arith.addf %505, %549 : vector<1x256xf32>
      %551 = arith.negf %550 : vector<1x256xf32>
      %552 = math.exp %551 : vector<1x256xf32>
      %cst_79 = arith.constant 1.000000e+00 : f32
      %553 = vector.broadcast %cst_79 : f32 to vector<1x256xf32>
      %554 = arith.addf %553, %552 : vector<1x256xf32>
      %555 = arith.divf %553, %554 : vector<1x256xf32>
      %c0_80 = arith.constant 0 : index
      %c0_81 = arith.constant 0 : index
      %c0_82 = arith.constant 0 : index
      %556 = vector.load %arg5[%c0_80, %c0_81, %c0_82] : memref<1x1x256xf32, #tpu.memory_space<vmem>>, vector<1x1x256xf32>
      %557 = vector.shape_cast %556 : vector<1x1x256xf32> to vector<1x256xf32>
      %558 = vector.shape_cast %555 : vector<1x256xf32> to vector<1x1x256xf32>
      tpu.vector_store %arg5[%c0_80, %c0_81, %c0_82], %558 {strides = array<i32>} : memref<1x1x256xf32, #tpu.memory_space<vmem>>, vector<1x1x256xf32>,
    } else {
    }
    return
  }
  func.func @transform_0(%arg0: i32, %arg1: i32) -> i32 {
    %c0_i32 = arith.constant 0 : i32
    %c0_i32_0 = arith.constant 0 : i32
    return %c0_i32 : i32
  }
  func.func @transform_1(%arg0: i32, %arg1: i32) -> (i32, i32) {
    %c0_i32 = arith.constant 0 : i32
    %c0_i32_0 = arith.constant 0 : i32
    %c0_i32_1 = arith.constant 0 : i32
    return %c0_i32, %c0_i32_0 : i32, i32
  }
  func.func @transform_2(%arg0: i32, %arg1: i32) -> (i32, i32, i32) {
    %c0_i32 = arith.constant 0 : i32
    %c0_i32_0 = arith.constant 0 : i32
    return %arg0, %arg1, %c0_i32 : i32, i32, i32
  }
  func.func @transform_3(%arg0: i32, %arg1: i32) -> (i32, i32, i32) {
    %c0_i32 = arith.constant 0 : i32
    %c0_i32_0 = arith.constant 0 : i32
    %c0_i32_1 = arith.constant 0 : i32
    return %arg0, %c0_i32, %c0_i32_0 : i32, i32, i32
  }
}

</mosaic_0001>

<llo_original>
// kernel: tpu_custom_call.1
$region0: #{tpu_custom_call.1}
  #allocation0 [shape = 'u32[]', space=smem, size = 0x4, offset = 0x4, fixed_abs, tag = 'smem constant byte address 0x4 - core index']
  #allocation1 [shape = 'u32[144,128]{1,0:T(1,128)}', space=vmem, size = 0x12000, scoped, tag = 'internal scratch']
  #allocation2 [shape = 'f32[1,256]{1,0:T(1,128)}', space=vmem, size = 0x400, scoped, tag = 'scratch operand']
  #allocation3 [shape = 'f32[1,256]{1,0:T(1,128)}', space=vmem, size = 0x400, scoped, tag = 'scratch operand']
  %s0 = inlined_call_operand.hbm [shape: f32[98], index: 0, kind: input, shape index: {}]
  %s1 = inlined_call_operand.hbm [shape: s32[2,256], index: 1, kind: input, shape index: {}]
  %s2 = inlined_call_operand.hbm [shape: f32[2,4,256], index: 2, kind: input, shape index: {}]
  %s3 = inlined_call_operand.hbm [shape: f32[2,1,256], index: 3, kind: output, shape index: {}]
  %s4 = sld [smem:[#allocation0]]
  $region65: #{tpu_custom_call.1} parent=0
    _
  %s6 = ssub.s32 1, %s4
  %s7 = scalar_select 0, %s6, %s4
  $region1: #{tpu_custom_call.1} parent=0
    #allocation4 [shape = 'u8[512]{0}', space=smem, size = 0x200, scoped, tag = 'input window, operand 0, single buffered']
    #allocation5 [shape = 's32[2]{0}', space=sflag, size = 0x8, scoped, tag = 'scoped memory for tpu_custom_call.1']
    #allocation6 [shape = 's32[2]{0}', space=sflag, size = 0x8, scoped, tag = 'scoped memory for tpu_custom_call.1']
    #allocation7 [shape = 's32[2]{0}', space=sflag, size = 0x8, scoped, tag = 'scoped memory for tpu_custom_call.1']
    #allocation8 [shape = 'u8[2048]{0}', space=vmem, size = 0x800, scoped, tag = 'input window, operand 1, single buffered']
    #allocation9 [shape = 'u8[8192]{0}', space=vmem, size = 0x2000, scoped, tag = 'input window, operand 2']
    #allocation10 [shape = 's32[2]{0}', space=sflag, size = 0x8, scoped, tag = 'scoped memory for tpu_custom_call.1']
    #allocation11 [shape = 'u8[2048]{0}', space=vmem, size = 0x800, scoped, tag = 'output window, operand 0']
    %8 = vsyncpa [#allocation7], 0
    %9 = vsyncpa [#allocation5], 0
    %10 = vsyncpa [#allocation10], 0
    %s11 = scalar_lea.sflag [#allocation10], 1
    %12 = vsyncpa %s11, 0
    %13 = vsyncpa [#allocation6], 0
    %s14 = scalar_lea.sflag [#allocation6], 1
    %15 = vsyncpa %s14, 0
    loop: start=0, step=1, limit=4
    $region2: #{tpu_custom_call.1} parent=1 // loop_pre_header
      _
    $region3: #{tpu_custom_call.1} parent=1 // loop_header
      %s17 = sphi 0, %s21
      %p18 = scmp.ge.s32.totalorder %s17, 4
      %s24 = sphi 0, %s36
      %s25 = sphi 0, %s32
      %s26 = sphi 0, %s24
      %s27 = sphi 0, %s25
      %s28 = sphi 0, %s26
      %s29 = sphi 0, %s27
      %s37 = sphi 0, %s37
      %s39 = sphi 0, %s37
      %s40 = sphi 0, %s39
      %s54 = sphi 0, %s40
      %s58 = sphi 0, %s58
      %s60 = sphi 0, %s58
      %s61 = sphi 0, %s60
      %s75 = sphi 0, %s61
      %s83 = sphi 0, %s85
      %s86 = sphi 0, %s83
      %s87 = sphi 0, %s86
      %s103 = sphi 0, %s87
      %s109 = sphi 0, %s111
      %s112 = sphi 0, %s109
      %s113 = sphi 0, %s112
      %s129 = sphi 0, %s113
    $region4: #{tpu_custom_call.1} parent=1 // loop_header_branch
      %20 = sbr.rel (%p18) target = $region8
    $region5: #{tpu_custom_call.1} parent=1 // loop_body
      %s22 = ssub.s32 %s17, 1
      %s23 = ssub.s32 %s17, 2
      %s30 = sadd.s32 1, %s25
      %p31 = scmp.ge.s32.totalorder %s30, 1
      %s32 = scalar_select %p31, 0, %s30
      %s33 = sadd.s32 1, %s24
      %s34 = scalar_select %p31, %s33, %s24
      %p35 = scmp.ge.s32.totalorder %s34, 2
      %s36 = scalar_select %p35, 0, %s34
      %s38 = sadd.s32 %s37, 1
      %p41 = scmp.eq.s32.totalorder %s17, 1
      %p42 = scmp.ne.s32.totalorder %s37, %s39
      %p43 = scmp.eq.s32.totalorder %s17, 0
      %p44 = por %p42, %p43
      %p45 = scmp.ne.s32.totalorder %s37, %s39
      %p46 = scmp.eq.s32.totalorder %s22, 1
      %p47 = por %p45, %p46
      %p48 = scmp.ne.s32.totalorder %s39, %s40
      %p49 = scmp.eq.s32.totalorder %s22, 0
      %p50 = por %p48, %p49
      %p51 = scmp.ne.s32.totalorder %s39, %s40
      %p52 = scmp.eq.s32.totalorder %s23, 1
      %p53 = por %p51, %p52
      %p55 = scmp.ne.s32.totalorder %s40, %s54
      %p56 = scmp.eq.s32.totalorder %s23, 0
      %p57 = por %p55, %p56
      %s59 = sadd.s32 %s58, 1
      %p62 = scmp.eq.s32.totalorder %s17, 1
      %p63 = scmp.ne.s32.totalorder %s58, %s60
      %p64 = scmp.eq.s32.totalorder %s17, 0
      %p65 = por %p63, %p64
      %p66 = scmp.ne.s32.totalorder %s58, %s60
      %p67 = scmp.eq.s32.totalorder %s22, 1
      %p68 = por %p66, %p67
      %p69 = scmp.ne.s32.totalorder %s60, %s61
      %p70 = scmp.eq.s32.totalorder %s22, 0
      %p71 = por %p69, %p70
      %p72 = scmp.ne.s32.totalorder %s60, %s61
      %p73 = scmp.eq.s32.totalorder %s23, 1
      %p74 = por %p72, %p73
      %p76 = scmp.ne.s32.totalorder %s61, %s75
      %p77 = scmp.eq.s32.totalorder %s23, 0
      %p78 = por %p76, %p77
      %s79 = ssub.s32 %s24, %s36
      %s80 = ssub.s32 %s25, %s32
      %s81 = sor.u32 %s79, %s80
      %p82 = scmp.eq.s32.totalorder %s81, 0
      %s84 = sadd.s32 %s83, 1
      %s85 = scalar_select %p82, %s83, %s84
      %p88 = pneg %p82
      %p89 = scmp.eq.s32.totalorder %s17, 1
      %p90 = por %p88, %p89
      %p91 = scmp.ne.s32.totalorder %s83, %s86
      %p92 = scmp.eq.s32.totalorder %s17, 0
      %p93 = por %p91, %p92
      %p94 = scmp.ne.s32.totalorder %s83, %s86
      %p95 = scmp.eq.s32.totalorder %s22, 1
      %p96 = por %p94, %p95
      %p97 = scmp.ne.s32.totalorder %s86, %s87
      %p98 = scmp.eq.s32.totalorder %s22, 0
      %p99 = por %p97, %p98
      %p100 = scmp.ne.s32.totalorder %s86, %s87
      %p101 = scmp.eq.s32.totalorder %s23, 1
      %p102 = por %p100, %p101
      %p104 = scmp.ne.s32.totalorder %s87, %s103
      %p105 = scmp.eq.s32.totalorder %s23, 0
      %p106 = por %p104, %p105
      %s107 = ssub.s32 %s24, %s36
      %p108 = scmp.eq.s32.totalorder %s107, 0
      %s110 = sadd.s32 %s109, 1
      %s111 = scalar_select %p108, %s109, %s110
      %p114 = pneg %p108
      %p115 = scmp.eq.s32.totalorder %s17, 1
      %p116 = por %p114, %p115
      %p117 = scmp.ne.s32.totalorder %s109, %s112
      %p118 = scmp.eq.s32.totalorder %s17, 0
      %p119 = por %p117, %p118
      %p120 = scmp.ne.s32.totalorder %s109, %s112
      %p121 = scmp.eq.s32.totalorder %s22, 1
      %p122 = por %p120, %p121
      %p123 = scmp.ne.s32.totalorder %s112, %s113
      %p124 = scmp.eq.s32.totalorder %s22, 0
      %p125 = por %p123, %p124
      %p126 = scmp.ne.s32.totalorder %s112, %s113
      %p127 = scmp.eq.s32.totalorder %s23, 1
      %p128 = por %p126, %p127
      %p130 = scmp.ne.s32.totalorder %s113, %s129
      %p131 = scmp.eq.s32.totalorder %s23, 0
      %p132 = por %p130, %p131
      %p133 = scmp.le.s32.totalorder 1, %s17
      %p134 = scmp.lt.s32.totalorder %s17, 3
      %p135 = pnand %p133, %p134
      %p136 = pneg %p135
      // Predicated region
      $region9: #{tpu_custom_call.1} parent=5 // pred_check
        _
      $region10: #{tpu_custom_call.1} parent=5 // pred_check_branch
        %138 = sbr.rel (%p135) target = $region12
      $region11: #{tpu_custom_call.1} parent=5 // pred_region
        %s139 = ssub.s32 %s17, 1
        // Predicated region
        $region13: #{tpu_custom_call.1} parent=11 // pred_check
          %p140 = pneg %p50
        $region14: #{tpu_custom_call.1} parent=11 // pred_check_branch
          %142 = sbr.rel (%p140) target = $region16
        $region15: #{tpu_custom_call.1} parent=11 // pred_region
          %s144 = ssub.s32 16, 16
          %145 = vsyncadd [#allocation7], %s144
          %148 = dma.hbm_to_smem %s0, 16, [#allocation4], [#allocation7]
        $region16: #{tpu_custom_call.1} parent=11 // pred_fallthru
          _
        // Predicated region
        $region17: #{tpu_custom_call.1} parent=11 // pred_check
          %p149 = pneg %p71
        $region18: #{tpu_custom_call.1} parent=11 // pred_check_branch
          %151 = sbr.rel (%p149) target = $region20
        $region19: #{tpu_custom_call.1} parent=11 // pred_region
          %s153 = ssub.s32 64, 64
          %154 = vsyncadd [#allocation5], %s153
          %s156 = sshll.u32 [#allocation8], 4
          %s157 = int_to_ptr.vmem [resolvable:$true] %s156
          %159 = dma.hbm_to_vmem [thread:$0]  %s1, 64, %s157, [#allocation5]
        $region20: #{tpu_custom_call.1} parent=11 // pred_fallthru
          _
      $region12: #{tpu_custom_call.1} parent=5 // pred_fallthru
        _
      %p160 = scmp.lt.s32.totalorder %s17, 2
      // Predicated region
      $region21: #{tpu_custom_call.1} parent=5 // pred_check
        %p161 = pneg %p160
      $region22: #{tpu_custom_call.1} parent=5 // pred_check_branch
        %163 = sbr.rel (%p161) target = $region24
      $region23: #{tpu_custom_call.1} parent=5 // pred_region
        // Predicated region
        $region25: #{tpu_custom_call.1} parent=23 // pred_check
          %p164 = pneg %p93
        $region26: #{tpu_custom_call.1} parent=23 // pred_check_branch
          %166 = sbr.rel (%p164) target = $region28
        $region27: #{tpu_custom_call.1} parent=23 // pred_region
          %s167 = sand.u32 %s83, 1
          %s168 = scalar_lea.sflag [#allocation10], %s167
          %s169 = sand.u32 %s83, 1
          %s170 = smul.addr %s169, 8
          %s171 = scalar_lea.vmem [#allocation9], %s170
          %s173 = ssub.s32 128, 128
          %174 = vsyncadd %s168, %s173
          %s175 = smul.addr %s25, 2
          %s176 = smul.addr %s24, 2
          %s177 = sadd.s32 %s175, %s176
          %s178 = smul.addr %s177, 64
          %s179 = scalar_lea.hbm %s2, %s178
          %s181 = sshll.u32 %s171, 4
          %s182 = int_to_ptr.vmem [resolvable:$true] %s181
          %184 = dma.hbm_to_vmem [thread:$0]  %s179, 128, %s182, %s168
        $region28: #{tpu_custom_call.1} parent=23 // pred_fallthru
          _
      $region24: #{tpu_custom_call.1} parent=5 // pred_fallthru
        _
      %p185 = scmp.le.s32.totalorder 1, %s17
      %p186 = scmp.lt.s32.totalorder %s17, 3
      %p187 = pnand %p185, %p186
      %p188 = pneg %p187
      // Predicated region
      $region29: #{tpu_custom_call.1} parent=5 // pred_check
        _
      $region30: #{tpu_custom_call.1} parent=5 // pred_check_branch
        %190 = sbr.rel (%p187) target = $region32
      $region31: #{tpu_custom_call.1} parent=5 // pred_region
        %s191 = ssub.s32 %s17, 1
        // Predicated region
        $region33: #{tpu_custom_call.1} parent=31 // pred_check
          %p192 = pneg %p50
        $region34: #{tpu_custom_call.1} parent=31 // pred_check_branch
          %194 = sbr.rel (%p192) target = $region36
        $region35: #{tpu_custom_call.1} parent=31 // pred_region
          %195 = dma.done [#allocation7], 16
        $region36: #{tpu_custom_call.1} parent=31 // pred_fallthru
          _
        // Predicated region
        $region37: #{tpu_custom_call.1} parent=31 // pred_check
          %p196 = pneg %p71
        $region38: #{tpu_custom_call.1} parent=31 // pred_check_branch
          %198 = sbr.rel (%p196) target = $region40
        $region39: #{tpu_custom_call.1} parent=31 // pred_region
          %199 = dma.done [#allocation5], 64
        $region40: #{tpu_custom_call.1} parent=31 // pred_fallthru
          _
        %s200 = sand.u32 %s86, 1
        %s201 = scalar_lea.sflag [#allocation10], %s200
        %s202 = sand.u32 %s86, 1
        %s203 = smul.addr %s202, 8
        %s204 = scalar_lea.vmem [#allocation9], %s203
        // Predicated region
        $region41: #{tpu_custom_call.1} parent=31 // pred_check
          %p205 = pneg %p99
        $region42: #{tpu_custom_call.1} parent=31 // pred_check_branch
          %207 = sbr.rel (%p205) target = $region44
        $region43: #{tpu_custom_call.1} parent=31 // pred_region
          %208 = dma.done %s201, 128
        $region44: #{tpu_custom_call.1} parent=31 // pred_fallthru
          _
        %209 = sfence
        %p210 = pneg %p50
        %p211 = pneg %p47
        %p212 = pneg %p71
        %p213 = pneg %p68
        %s214 = sand.u32 %s86, 1
        %s215 = scalar_lea.sflag [#allocation10], %s214
        %s216 = sand.u32 %s86, 1
        %s217 = smul.addr %s216, 8
        %s218 = scalar_lea.vmem [#allocation9], %s217
        %p219 = pneg %p99
        %p220 = pneg %p96
        %p221 = pneg %p125
        %p222 = pneg %p122
        %s223 = sand.u32 %s112, 1
        %s224 = scalar_lea.sflag [#allocation6], %s223
        %s225 = sand.u32 %s112, 1
        %s226 = smul.addr %s225, 2
        %s227 = scalar_lea.vmem [#allocation11], %s226
        %p228 = scmp.eq.s32.totalorder %s27, 0
        // Predicated region
        $region45: #{tpu_custom_call.1} parent=31 // pred_check
          %p229 = pneg %p228
        $region46: #{tpu_custom_call.1} parent=31 // pred_check_branch
          %231 = sbr.rel (%p229) target = $region48
        $region47: #{tpu_custom_call.1} parent=31 // pred_region
          %v232 = vlaneseq
          %vm233 = vcmp.ge.s32.totalorder %v232, 0
          %vm234 = vcmp.lt.s32.totalorder %v232, 256
          %vm235 = vmand %vm233, %vm234
          %236 = vst.msk [vmem:[#allocation2] sm:$0x3] %vm235, 0.0
          %237 = vst.msk [vmem:[#allocation3] sm:$0x3] %vm235, -inf
        $region48: #{tpu_custom_call.1} parent=31 // pred_fallthru
          _
        %v238 = vld [vmem:[%s204] sm:$0xff]
        %v240 = vcombine.high %v238, %v238
        %vm242 = vcmask 1043456
        %v243 = vsel %vm242, %v238, 0.0
        %v244 = vrot.slane %v243, 4
        %v245 = vadd.f32 %v243, %v244
        %v246 = vrot.slane %v245, 2
        %v247 = vadd.f32 %v245, %v246
        %v248 = vrot.slane %v247, 1
        %v249 = vadd.f32 %v247, %v248
        %v250 = vsel %vm242, %v240, 0.0
        %v251 = vrot.slane %v250, 4
        %v252 = vadd.f32 %v250, %v251
        %v253 = vrot.slane %v252, 2
        %v254 = vadd.f32 %v252, %v253
        %v255 = vrot.slane %v254, 1
        %v256 = vadd.f32 %v254, %v255
        %v257 = vsel %vm242, %v238, -inf
        %v258 = vrot.slane %v257, 4
        %v259 = vmax.f32 %v257, %v258
        %v260 = vrot.slane %v259, 2
        %v261 = vmax.f32 %v259, %v260
        %v262 = vrot.slane %v261, 1
        %v263 = vmax.f32 %v261, %v262
        %v264 = vsel %vm242, %v240, -inf
        %v265 = vrot.slane %v264, 4
        %v266 = vmax.f32 %v264, %v265
        %v267 = vrot.slane %v266, 2
        %v268 = vmax.f32 %v266, %v267
        %v269 = vrot.slane %v268, 1
        %v270 = vmax.f32 %v268, %v269
        %v271 = vld [vmem:[#allocation2] sm:$0x3]
        %v274 = vcombine.low %v249, %v256
        %v276 = vunpack.c.l.s4 1966171168
        %v277 = vunpack.c.0.s8 %v276
        %v278 = vlaneseq
        %v279 = vshrl.u32 %v278, 7
        %v280 = vsub.s32 %v277, %v279
        %v281 = vrot.slane %v274, %v280
        %v283 = vunpack.c.l.s4 1966171168
        %v284 = vunpack.c.0.s8 %v283
        %v285 = vlaneseq
        %v286 = vshrl.u32 %v285, 7
        %v287 = vsub.s32 %v284, %v286
        %v288 = vrot.slane %v281, %v287
        %v290 = vadd.f32 %v271, %v288
        %v291 = vlaneseq
        %vm292 = vcmp.ge.s32.totalorder %v291, 0
        %vm293 = vcmp.lt.s32.totalorder %v291, 256
        %vm294 = vmand %vm292, %vm293
        %295 = vst.msk [vmem:[#allocation2] sm:$0x3] %vm294, %v290
        %v296 = vld [vmem:[#allocation3] sm:$0x3]
        %v299 = vcombine.low %v263, %v270
        %v301 = vunpack.c.l.s4 1966171168
        %v302 = vunpack.c.0.s8 %v301
        %v303 = vlaneseq
        %v304 = vshrl.u32 %v303, 7
        %v305 = vsub.s32 %v302, %v304
        %v306 = vrot.slane %v299, %v305
        %v308 = vunpack.c.l.s4 1966171168
        %v309 = vunpack.c.0.s8 %v308
        %v310 = vlaneseq
        %v311 = vshrl.u32 %v310, 7
        %v312 = vsub.s32 %v309, %v311
        %v313 = vrot.slane %v306, %v312
        %v315 = vmax.f32 %v296, %v313
        %316 = vst.msk [vmem:[#allocation3] sm:$0x3] %vm294, %v315
        // Predicated region
        $region49: #{tpu_custom_call.1} parent=31 // pred_check
          %p317 = pneg %p228
        $region50: #{tpu_custom_call.1} parent=31 // pred_check_branch
          %319 = sbr.rel (%p317) target = $region52
        $region51: #{tpu_custom_call.1} parent=31 // pred_region
          %v320 = vld [vmem:[#allocation2] sm:$0x3]
          %v321 = vmul.f32 %v320, 0.25
          %v322 = vld [vmem:[#allocation3] sm:$0x3]
          %s323 = sld [smem:[#allocation4]]
          %s324 = sld [smem:[#allocation4 + $0x1]]
          %s325 = sld [smem:[#allocation4 + $0x2]]
          %s326 = sld [smem:[#allocation4 + $0x3]]
          %s327 = sld [smem:[#allocation4 + $0x4]]
          %s328 = sld [smem:[#allocation4 + $0x5]]
          %s329 = sld [smem:[#allocation4 + $0x6]]
          %s330 = sld [smem:[#allocation4 + $0x7]]
          %s331 = sld [smem:[#allocation4 + $0x8]]
          %s332 = sld [smem:[#allocation4 + $0x9]]
          %s333 = sld [smem:[#allocation4 + $0xa]]
          %s334 = sld [smem:[#allocation4 + $0xb]]
          %s335 = sld [smem:[#allocation4 + $0xc]]
          %s336 = sld [smem:[#allocation4 + $0xd]]
          %s337 = sld [smem:[#allocation4 + $0xe]]
          %s338 = sld [smem:[#allocation4 + $0xf]]
          %s339 = sld [smem:[#allocation4 + $0x10]]
          %s340 = sld [smem:[#allocation4 + $0x11]]
          %s341 = sld [smem:[#allocation4 + $0x12]]
          %s342 = sld [smem:[#allocation4 + $0x13]]
          %s343 = sld [smem:[#allocation4 + $0x14]]
          %s344 = sld [smem:[#allocation4 + $0x15]]
          %s345 = sld [smem:[#allocation4 + $0x16]]
          %s346 = sld [smem:[#allocation4 + $0x17]]
          %s347 = sld [smem:[#allocation4 + $0x18]]
          %s348 = sld [smem:[#allocation4 + $0x19]]
          %s349 = sld [smem:[#allocation4 + $0x1a]]
          %s350 = sld [smem:[#allocation4 + $0x1b]]
          %s351 = sld [smem:[#allocation4 + $0x1c]]
          %s352 = sld [smem:[#allocation4 + $0x1d]]
          %s353 = sld [smem:[#allocation4 + $0x1e]]
          %s354 = sld [smem:[#allocation4 + $0x1f]]
          %s355 = sld [smem:[#allocation4 + $0x20]]
          %s356 = sld [smem:[#allocation4 + $0x21]]
          %s357 = sld [smem:[#allocation4 + $0x22]]
          %s358 = sld [smem:[#allocation4 + $0x23]]
          %s359 = sld [smem:[#allocation4 + $0x24]]
          %s360 = sld [smem:[#allocation4 + $0x25]]
          %s361 = sld [smem:[#allocation4 + $0x26]]
          %s362 = sld [smem:[#allocation4 + $0x27]]
          %s363 = sld [smem:[#allocation4 + $0x28]]
          %s364 = sld [smem:[#allocation4 + $0x29]]
          %s365 = sld [smem:[#allocation4 + $0x2a]]
          %s366 = sld [smem:[#allocation4 + $0x2b]]
          %s367 = sld [smem:[#allocation4 + $0x2c]]
          %s368 = sld [smem:[#allocation4 + $0x2d]]
          %s369 = sld [smem:[#allocation4 + $0x2e]]
          %s370 = sld [smem:[#allocation4 + $0x2f]]
          %s371 = sld [smem:[#allocation4 + $0x30]]
          %s372 = sld [smem:[#allocation4 + $0x31]]
          %s373 = sld [smem:[#allocation4 + $0x32]]
          %s374 = sld [smem:[#allocation4 + $0x33]]
          %s375 = sld [smem:[#allocation4 + $0x34]]
          %s376 = sld [smem:[#allocation4 + $0x35]]
          %s377 = sld [smem:[#allocation4 + $0x36]]
          %s378 = sld [smem:[#allocation4 + $0x37]]
          %s379 = sld [smem:[#allocation4 + $0x38]]
          %s380 = sld [smem:[#allocation4 + $0x39]]
          %s381 = sld [smem:[#allocation4 + $0x3a]]
          %s382 = sld [smem:[#allocation4 + $0x3b]]
          %s383 = sld [smem:[#allocation4 + $0x3c]]
          %s384 = sld [smem:[#allocation4 + $0x3d]]
          %s385 = sld [smem:[#allocation4 + $0x3e]]
          %s386 = sld [smem:[#allocation4 + $0x3f]]
          %s387 = sld [smem:[#allocation4 + $0x40]]
          %s388 = sld [smem:[#allocation4 + $0x41]]
          %s389 = sld [smem:[#allocation4 + $0x42]]
          %s390 = sld [smem:[#allocation4 + $0x43]]
          %s391 = sld [smem:[#allocation4 + $0x44]]
          %s392 = sld [smem:[#allocation4 + $0x45]]
          %s393 = sld [smem:[#allocation4 + $0x46]]
          %s394 = sld [smem:[#allocation4 + $0x47]]
          %s395 = sld [smem:[#allocation4 + $0x48]]
          %s396 = sld [smem:[#allocation4 + $0x49]]
          %s397 = sld [smem:[#allocation4 + $0x4a]]
          %s398 = sld [smem:[#allocation4 + $0x4b]]
          %s399 = sld [smem:[#allocation4 + $0x4c]]
          %s400 = sld [smem:[#allocation4 + $0x4d]]
          %s401 = sld [smem:[#allocation4 + $0x4e]]
          %s402 = sld [smem:[#allocation4 + $0x4f]]
          %s403 = sld [smem:[#allocation4 + $0x50]]
          %s404 = sld [smem:[#allocation4 + $0x51]]
          %s405 = sld [smem:[#allocation4 + $0x52]]
          %s406 = sld [smem:[#allocation4 + $0x53]]
          %s407 = sld [smem:[#allocation4 + $0x54]]
          %s408 = sld [smem:[#allocation4 + $0x55]]
          %s409 = sld [smem:[#allocation4 + $0x56]]
          %s410 = sld [smem:[#allocation4 + $0x57]]
          %s411 = sld [smem:[#allocation4 + $0x58]]
          %s412 = sld [smem:[#allocation4 + $0x59]]
          %s413 = sld [smem:[#allocation4 + $0x5a]]
          %s414 = sld [smem:[#allocation4 + $0x5b]]
          %s415 = sld [smem:[#allocation4 + $0x5c]]
          %s416 = sld [smem:[#allocation4 + $0x5d]]
          %s417 = sld [smem:[#allocation4 + $0x5e]]
          %s418 = sld [smem:[#allocation4 + $0x5f]]
          %s419 = sld [smem:[#allocation4 + $0x60]]
          %s420 = sld [smem:[#allocation4 + $0x61]]
          %v421 = vld [vmem:[#allocation8] sm:$0xf]
          %v422 = vadd.s32 %v421, 4294967293
          %vm423 = vcmp.ge.s32.totalorder %v422, 0
          %vm424 = vcmp.lt.s32.totalorder %v422, 16
          %vm425 = vmand %vm423, %vm424
          %v426 = vadd.s32 %v421, 4294967294
          %vm427 = vcmp.ge.s32.totalorder %v426, 0
          %vm428 = vcmp.lt.s32.totalorder %v426, 16
          %vm429 = vmand %vm427, %vm428
          %v430 = vadd.s32 %v421, 4294967295
          %vm431 = vcmp.ge.s32.totalorder %v430, 0
          %vm432 = vcmp.lt.s32.totalorder %v430, 16
          %vm433 = vmand %vm431, %vm432
          %v434 = vadd.s32 %v421, 1
          %vm435 = vcmp.ge.s32.totalorder %v434, 0
          %vm436 = vcmp.lt.s32.totalorder %v434, 16
          %vm437 = vmand %vm435, %vm436
          %v438 = vadd.s32 %v421, 2
          %vm439 = vcmp.ge.s32.totalorder %v438, 0
          %vm440 = vcmp.lt.s32.totalorder %v438, 16
          %vm441 = vmand %vm439, %vm440
          %v442 = vadd.s32 %v421, 3
          %vm443 = vcmp.ge.s32.totalorder %v442, 0
          %vm444 = vcmp.lt.s32.totalorder %v442, 16
          %vm445 = vmand %vm443, %vm444
          %v447 = vlaneseq
          %v448 = vshrl.u32 %v447, 7
          %v449 = vsub.s32 0, %v448
          %v450 = vrot.slane %v321, %v449
          %v451 = vlaneseq
          %v452 = vshrl.u32 %v451, 7
          %v453 = vsub.s32 1, %v452
          %v454 = vrot.slane %v321, %v453
          %457 = vrot.lane.b32.xlu0 %v450, 3
          %v458 = vpop.permute.xlu0 %457
          %459 = vrot.lane.b32.xlu0 %v454, 3
          %v460 = vpop.permute.xlu0 %459
          %v461 = vlaneseq
          %v462 = vand.u32 %v461, 127
          %vm463 = vcmp.lt.s32.totalorder %v462, 3
          %v464 = vsel %vm463, %v458, %v460
          %v465 = vsel %vm463, %v460, %v458
          %v468 = vcombine.low %v465, %v464
          %v470 = vunpack.c.l.s4 1983009808
          %v471 = vunpack.c.0.s8 %v470
          %v472 = vlaneseq
          %v473 = vshrl.u32 %v472, 7
          %v474 = vsub.s32 %v471, %v473
          %v475 = vrot.slane %v468, %v474
          %v476 = vrot.slane %v475, 7
          %v478 = vsel %vm425, %v476, 0.0
          %479 = vrot.lane.b32.xlu0 %v450, 2
          %v480 = vpop.permute.xlu0 %479
          %481 = vrot.lane.b32.xlu0 %v454, 2
          %v482 = vpop.permute.xlu0 %481
          %vm483 = vcmp.lt.s32.totalorder %v462, 2
          %v484 = vsel %vm483, %v480, %v482
          %v485 = vsel %vm483, %v482, %v480
          %v488 = vcombine.low %v485, %v484
          %v490 = vunpack.c.l.s4 1983009808
          %v491 = vunpack.c.0.s8 %v490
          %v492 = vlaneseq
          %v493 = vshrl.u32 %v492, 7
          %v494 = vsub.s32 %v491, %v493
          %v495 = vrot.slane %v488, %v494
          %v496 = vrot.slane %v495, 7
          %v498 = vsel %vm429, %v496, 0.0
          %499 = vrot.lane.b32.xlu0 %v450, 1
          %v500 = vpop.permute.xlu0 %499
          %501 = vrot.lane.b32.xlu0 %v454, 1
          %v502 = vpop.permute.xlu0 %501
          %vm503 = vcmp.lt.s32.totalorder %v462, 1
          %v504 = vsel %vm503, %v500, %v502
          %v505 = vsel %vm503, %v502, %v500
          %v508 = vcombine.low %v505, %v504
          %v510 = vunpack.c.l.s4 1983009808
          %v511 = vunpack.c.0.s8 %v510
          %v512 = vlaneseq
          %v513 = vshrl.u32 %v512, 7
          %v514 = vsub.s32 %v511, %v513
          %v515 = vrot.slane %v508, %v514
          %v516 = vrot.slane %v515, 7
          %v518 = vsel %vm433, %v516, 0.0
          %519 = vrot.lane.b32.xlu0 %v450, 127
          %v520 = vpop.permute.xlu0 %519
          %521 = vrot.lane.b32.xlu0 %v454, 127
          %v522 = vpop.permute.xlu0 %521
          %vm523 = vcmp.lt.s32.totalorder %v462, 127
          %v524 = vsel %vm523, %v520, %v522
          %v525 = vsel %vm523, %v522, %v520
          %v528 = vcombine.low %v524, %v525
          %v530 = vunpack.c.l.s4 1983009808
          %v531 = vunpack.c.0.s8 %v530
          %v532 = vlaneseq
          %v533 = vshrl.u32 %v532, 7
          %v534 = vsub.s32 %v531, %v533
          %v535 = vrot.slane %v528, %v534
          %v536 = vrot.slane %v535, 7
          %v538 = vsel %vm437, %v536, 0.0
          %539 = vrot.lane.b32.xlu0 %v450, 126
          %v540 = vpop.permute.xlu0 %539
          %541 = vrot.lane.b32.xlu0 %v454, 126
          %v542 = vpop.permute.xlu0 %541
          %vm543 = vcmp.lt.s32.totalorder %v462, 126
          %v544 = vsel %vm543, %v540, %v542
          %v545 = vsel %vm543, %v542, %v540
          %v548 = vcombine.low %v544, %v545
          %v550 = vunpack.c.l.s4 1983009808
          %v551 = vunpack.c.0.s8 %v550
          %v552 = vlaneseq
          %v553 = vshrl.u32 %v552, 7
          %v554 = vsub.s32 %v551, %v553
          %v555 = vrot.slane %v548, %v554
          %v556 = vrot.slane %v555, 7
          %v558 = vsel %vm441, %v556, 0.0
          %559 = vrot.lane.b32.xlu0 %v450, 125
          %v560 = vpop.permute.xlu0 %559
          %561 = vrot.lane.b32.xlu0 %v454, 125
          %v562 = vpop.permute.xlu0 %561
          %vm563 = vcmp.lt.s32.totalorder %v462, 125
          %v564 = vsel %vm563, %v560, %v562
          %v565 = vsel %vm563, %v562, %v560
          %v568 = vcombine.low %v564, %v565
          %v570 = vunpack.c.l.s4 1983009808
          %v571 = vunpack.c.0.s8 %v570
          %v572 = vlaneseq
          %v573 = vshrl.u32 %v572, 7
          %v574 = vsub.s32 %v571, %v573
          %v575 = vrot.slane %v568, %v574
          %v576 = vrot.slane %v575, 7
          %v578 = vsel %vm445, %v576, 0.0
          %v580 = vlaneseq
          %v581 = vshrl.u32 %v580, 7
          %v582 = vsub.s32 0, %v581
          %v583 = vrot.slane %v322, %v582
          %v584 = vlaneseq
          %v585 = vshrl.u32 %v584, 7
          %v586 = vsub.s32 1, %v585
          %v587 = vrot.slane %v322, %v586
          %590 = vrot.lane.b32.xlu0 %v583, 3
          %v591 = vpop.permute.xlu0 %590
          %592 = vrot.lane.b32.xlu0 %v587, 3
          %v593 = vpop.permute.xlu0 %592
          %v594 = vsel %vm463, %v591, %v593
          %v595 = vsel %vm463, %v593, %v591
          %v598 = vcombine.low %v595, %v594
          %v600 = vunpack.c.l.s4 1983009808
          %v601 = vunpack.c.0.s8 %v600
          %v602 = vlaneseq
          %v603 = vshrl.u32 %v602, 7
          %v604 = vsub.s32 %v601, %v603
          %v605 = vrot.slane %v598, %v604
          %v606 = vrot.slane %v605, 7
          %v608 = vsel %vm425, %v606, 0.0
          %609 = vrot.lane.b32.xlu0 %v583, 2
          %v610 = vpop.permute.xlu0 %609
          %611 = vrot.lane.b32.xlu0 %v587, 2
          %v612 = vpop.permute.xlu0 %611
          %v613 = vsel %vm483, %v610, %v612
          %v614 = vsel %vm483, %v612, %v610
          %v617 = vcombine.low %v614, %v613
          %v619 = vunpack.c.l.s4 1983009808
          %v620 = vunpack.c.0.s8 %v619
          %v621 = vlaneseq
          %v622 = vshrl.u32 %v621, 7
          %v623 = vsub.s32 %v620, %v622
          %v624 = vrot.slane %v617, %v623
          %v625 = vrot.slane %v624, 7
          %v627 = vsel %vm429, %v625, 0.0
          %628 = vrot.lane.b32.xlu0 %v583, 1
          %v629 = vpop.permute.xlu0 %628
          %630 = vrot.lane.b32.xlu0 %v587, 1
          %v631 = vpop.permute.xlu0 %630
          %v632 = vsel %vm503, %v629, %v631
          %v633 = vsel %vm503, %v631, %v629
          %v636 = vcombine.low %v633, %v632
          %v638 = vunpack.c.l.s4 1983009808
          %v639 = vunpack.c.0.s8 %v638
          %v640 = vlaneseq
          %v641 = vshrl.u32 %v640, 7
          %v642 = vsub.s32 %v639, %v641
          %v643 = vrot.slane %v636, %v642
          %v644 = vrot.slane %v643, 7
          %v646 = vsel %vm433, %v644, 0.0
          %647 = vrot.lane.b32.xlu0 %v583, 127
          %v648 = vpop.permute.xlu0 %647
          %649 = vrot.lane.b32.xlu0 %v587, 127
          %v650 = vpop.permute.xlu0 %649
          %v651 = vsel %vm523, %v648, %v650
          %v652 = vsel %vm523, %v650, %v648
          %v655 = vcombine.low %v651, %v652
          %v657 = vunpack.c.l.s4 1983009808
          %v658 = vunpack.c.0.s8 %v657
          %v659 = vlaneseq
          %v660 = vshrl.u32 %v659, 7
          %v661 = vsub.s32 %v658, %v660
          %v662 = vrot.slane %v655, %v661
          %v663 = vrot.slane %v662, 7
          %v665 = vsel %vm437, %v663, 0.0
          %666 = vrot.lane.b32.xlu0 %v583, 126
          %v667 = vpop.permute.xlu0 %666
          %668 = vrot.lane.b32.xlu0 %v587, 126
          %v669 = vpop.permute.xlu0 %668
          %v670 = vsel %vm543, %v667, %v669
          %v671 = vsel %vm543, %v669, %v667
          %v674 = vcombine.low %v670, %v671
          %v676 = vunpack.c.l.s4 1983009808
          %v677 = vunpack.c.0.s8 %v676
          %v678 = vlaneseq
          %v679 = vshrl.u32 %v678, 7
          %v680 = vsub.s32 %v677, %v679
          %v681 = vrot.slane %v674, %v680
          %v682 = vrot.slane %v681, 7
          %v684 = vsel %vm441, %v682, 0.0
          %685 = vrot.lane.b32.xlu0 %v583, 125
          %v686 = vpop.permute.xlu0 %685
          %687 = vrot.lane.b32.xlu0 %v587, 125
          %v688 = vpop.permute.xlu0 %687
          %v689 = vsel %vm563, %v686, %v688
          %v690 = vsel %vm563, %v688, %v686
          %v693 = vcombine.low %v689, %v690
          %v695 = vunpack.c.l.s4 1983009808
          %v696 = vunpack.c.0.s8 %v695
          %v697 = vlaneseq
          %v698 = vshrl.u32 %v697, 7
          %v699 = vsub.s32 %v696, %v698
          %v700 = vrot.slane %v693, %v699
          %v701 = vrot.slane %v700, 7
          %v703 = vsel %vm445, %v701, 0.0
          %v704 = vstv %s323
          %v705 = vmul.f32 %v478, %v704
          %v706 = vstv %s324
          %v707 = vmul.f32 %v498, %v706
          %v708 = vadd.f32 %v705, %v707
          %v709 = vstv %s325
          %v710 = vmul.f32 %v518, %v709
          %v711 = vadd.f32 %v708, %v710
          %v712 = vstv %s326
          %v713 = vmul.f32 %v321, %v712
          %v716 = vunpack.c.l.s4 857870592
          %v717 = vunpack.c.0.s8 %v716
          %v718 = vlaneseq
          %v719 = vshrl.u32 %v718, 7
          %v720 = vsub.s32 %v717, %v719
          %v721 = vrot.slane %v713, %v720
          %v723 = vadd.f32 %v711, %v721
          %v724 = vstv %s327
          %v725 = vmul.f32 %v538, %v724
          %v726 = vadd.f32 %v723, %v725
          %v727 = vstv %s328
          %v728 = vmul.f32 %v558, %v727
          %v729 = vadd.f32 %v726, %v728
          %v730 = vstv %s329
          %v731 = vmul.f32 %v578, %v730
          %v732 = vadd.f32 %v729, %v731
          %v733 = vstv %s372
          %v734 = vmul.f32 %v608, %v733
          %v735 = vadd.f32 %v732, %v734
          %v736 = vstv %s373
          %v737 = vmul.f32 %v627, %v736
          %v738 = vadd.f32 %v735, %v737
          %v739 = vstv %s374
          %v740 = vmul.f32 %v646, %v739
          %v741 = vadd.f32 %v738, %v740
          %v742 = vstv %s375
          %v743 = vmul.f32 %v322, %v742
          %v746 = vunpack.c.l.s4 857870592
          %v747 = vunpack.c.0.s8 %v746
          %v748 = vlaneseq
          %v749 = vshrl.u32 %v748, 7
          %v750 = vsub.s32 %v747, %v749
          %v751 = vrot.slane %v743, %v750
          %v753 = vadd.f32 %v741, %v751
          %v754 = vstv %s376
          %v755 = vmul.f32 %v665, %v754
          %v756 = vadd.f32 %v753, %v755
          %v757 = vstv %s377
          %v758 = vmul.f32 %v684, %v757
          %v759 = vadd.f32 %v756, %v758
          %v760 = vstv %s378
          %v761 = vmul.f32 %v703, %v760
          %v762 = vadd.f32 %v759, %v761
          %v764 = vlaneseq
          %v765 = vshrl.u32 %v764, 7
          %v766 = vsub.s32 1, %v765
          %v767 = vrot.slane %v762, %v766
          %v768 = vlaneseq
          %v769 = vshrl.u32 %v768, 7
          %v770 = vsub.s32 3, %v769
          %v771 = vrot.slane %v762, %v770
          %774 = vrot.lane.b32.xlu0 %v767, 48
          %v775 = vpop.permute.xlu0 %774
          %776 = vrot.lane.b32.xlu0 %v771, 48
          %v777 = vpop.permute.xlu0 %776
          %vm778 = vcmp.lt.s32.totalorder %v462, 48
          %v779 = vsel %vm778, %v775, %v777
          %v780 = vsel %vm778, %v777, %v775
          %v783 = vcombine.low %v780, %v779
          %v785 = vunpack.c.l.s4 1983009808
          %v786 = vunpack.c.0.s8 %v785
          %v787 = vlaneseq
          %v788 = vshrl.u32 %v787, 7
          %v789 = vsub.s32 %v786, %v788
          %v790 = vrot.slane %v783, %v789
          %v792 = vsel %vm425, %v790, 0.0
          %v793 = vstv %s330
          %v794 = vmul.f32 %v478, %v793
          %v795 = vstv %s331
          %v796 = vmul.f32 %v498, %v795
          %v797 = vadd.f32 %v794, %v796
          %v798 = vstv %s332
          %v799 = vmul.f32 %v518, %v798
          %v800 = vadd.f32 %v797, %v799
          %v801 = vstv %s333
          %v802 = vmul.f32 %v321, %v801
          %v805 = vunpack.c.l.s4 857870592
          %v806 = vunpack.c.0.s8 %v805
          %v807 = vlaneseq
          %v808 = vshrl.u32 %v807, 7
          %v809 = vsub.s32 %v806, %v808
          %v810 = vrot.slane %v802, %v809
          %v812 = vadd.f32 %v800, %v810
          %v813 = vstv %s334
          %v814 = vmul.f32 %v538, %v813
          %v815 = vadd.f32 %v812, %v814
          %v816 = vstv %s335
          %v817 = vmul.f32 %v558, %v816
          %v818 = vadd.f32 %v815, %v817
          %v819 = vstv %s336
          %v820 = vmul.f32 %v578, %v819
          %v821 = vadd.f32 %v818, %v820
          %v822 = vstv %s379
          %v823 = vmul.f32 %v608, %v822
          %v824 = vadd.f32 %v821, %v823
          %v825 = vstv %s380
          %v826 = vmul.f32 %v627, %v825
          %v827 = vadd.f32 %v824, %v826
          %v828 = vstv %s381
          %v829 = vmul.f32 %v646, %v828
          %v830 = vadd.f32 %v827, %v829
          %v831 = vstv %s382
          %v832 = vmul.f32 %v322, %v831
          %v835 = vunpack.c.l.s4 857870592
          %v836 = vunpack.c.0.s8 %v835
          %v837 = vlaneseq
          %v838 = vshrl.u32 %v837, 7
          %v839 = vsub.s32 %v836, %v838
          %v840 = vrot.slane %v832, %v839
          %v842 = vadd.f32 %v830, %v840
          %v843 = vstv %s383
          %v844 = vmul.f32 %v665, %v843
          %v845 = vadd.f32 %v842, %v844
          %v846 = vstv %s384
          %v847 = vmul.f32 %v684, %v846
          %v848 = vadd.f32 %v845, %v847
          %v849 = vstv %s385
          %v850 = vmul.f32 %v703, %v849
          %v851 = vadd.f32 %v848, %v850
          %v853 = vlaneseq
          %v854 = vshrl.u32 %v853, 7
          %v855 = vsub.s32 1, %v854
          %v856 = vrot.slane %v851, %v855
          %v857 = vlaneseq
          %v858 = vshrl.u32 %v857, 7
          %v859 = vsub.s32 3, %v858
          %v860 = vrot.slane %v851, %v859
          %863 = vrot.lane.b32.xlu0 %v856, 32
          %v864 = vpop.permute.xlu0 %863
          %865 = vrot.lane.b32.xlu0 %v860, 32
          %v866 = vpop.permute.xlu0 %865
          %vm867 = vcmp.lt.s32.totalorder %v462, 32
          %v868 = vsel %vm867, %v864, %v866
          %v869 = vsel %vm867, %v866, %v864
          %v872 = vcombine.low %v869, %v868
          %v874 = vunpack.c.l.s4 1983009808
          %v875 = vunpack.c.0.s8 %v874
          %v876 = vlaneseq
          %v877 = vshrl.u32 %v876, 7
          %v878 = vsub.s32 %v875, %v877
          %v879 = vrot.slane %v872, %v878
          %v881 = vsel %vm429, %v879, 0.0
          %v882 = vadd.f32 %v792, %v881
          %v883 = vstv %s337
          %v884 = vmul.f32 %v478, %v883
          %v885 = vstv %s338
          %v886 = vmul.f32 %v498, %v885
          %v887 = vadd.f32 %v884, %v886
          %v888 = vstv %s339
          %v889 = vmul.f32 %v518, %v888
          %v890 = vadd.f32 %v887, %v889
          %v891 = vstv %s340
          %v892 = vmul.f32 %v321, %v891
          %v895 = vunpack.c.l.s4 857870592
          %v896 = vunpack.c.0.s8 %v895
          %v897 = vlaneseq
          %v898 = vshrl.u32 %v897, 7
          %v899 = vsub.s32 %v896, %v898
          %v900 = vrot.slane %v892, %v899
          %v902 = vadd.f32 %v890, %v900
          %v903 = vstv %s341
          %v904 = vmul.f32 %v538, %v903
          %v905 = vadd.f32 %v902, %v904
          %v906 = vstv %s342
          %v907 = vmul.f32 %v558, %v906
          %v908 = vadd.f32 %v905, %v907
          %v909 = vstv %s343
          %v910 = vmul.f32 %v578, %v909
          %v911 = vadd.f32 %v908, %v910
          %v912 = vstv %s386
          %v913 = vmul.f32 %v608, %v912
          %v914 = vadd.f32 %v911, %v913
          %v915 = vstv %s387
          %v916 = vmul.f32 %v627, %v915
          %v917 = vadd.f32 %v914, %v916
          %v918 = vstv %s388
          %v919 = vmul.f32 %v646, %v918
          %v920 = vadd.f32 %v917, %v919
          %v921 = vstv %s389
          %v922 = vmul.f32 %v322, %v921
          %v925 = vunpack.c.l.s4 857870592
          %v926 = vunpack.c.0.s8 %v925
          %v927 = vlaneseq
          %v928 = vshrl.u32 %v927, 7
          %v929 = vsub.s32 %v926, %v928
          %v930 = vrot.slane %v922, %v929
          %v932 = vadd.f32 %v920, %v930
          %v933 = vstv %s390
          %v934 = vmul.f32 %v665, %v933
          %v935 = vadd.f32 %v932, %v934
          %v936 = vstv %s391
          %v937 = vmul.f32 %v684, %v936
          %v938 = vadd.f32 %v935, %v937
          %v939 = vstv %s392
          %v940 = vmul.f32 %v703, %v939
          %v941 = vadd.f32 %v938, %v940
          %v943 = vlaneseq
          %v944 = vshrl.u32 %v943, 7
          %v945 = vsub.s32 1, %v944
          %v946 = vrot.slane %v941, %v945
          %v947 = vlaneseq
          %v948 = vshrl.u32 %v947, 7
          %v949 = vsub.s32 3, %v948
          %v950 = vrot.slane %v941, %v949
          %953 = vrot.lane.b32.xlu0 %v946, 16
          %v954 = vpop.permute.xlu0 %953
          %955 = vrot.lane.b32.xlu0 %v950, 16
          %v956 = vpop.permute.xlu0 %955
          %vm957 = vcmp.lt.s32.totalorder %v462, 16
          %v958 = vsel %vm957, %v954, %v956
          %v959 = vsel %vm957, %v956, %v954
          %v962 = vcombine.low %v959, %v958
          %v964 = vunpack.c.l.s4 1983009808
          %v965 = vunpack.c.0.s8 %v964
          %v966 = vlaneseq
          %v967 = vshrl.u32 %v966, 7
          %v968 = vsub.s32 %v965, %v967
          %v969 = vrot.slane %v962, %v968
          %v971 = vsel %vm433, %v969, 0.0
          %v972 = vadd.f32 %v882, %v971
          %v973 = vstv %s344
          %v974 = vmul.f32 %v478, %v973
          %v975 = vstv %s345
          %v976 = vmul.f32 %v498, %v975
          %v977 = vadd.f32 %v974, %v976
          %v978 = vstv %s346
          %v979 = vmul.f32 %v518, %v978
          %v980 = vadd.f32 %v977, %v979
          %v981 = vstv %s347
          %v982 = vmul.f32 %v321, %v981
          %v985 = vunpack.c.l.s4 857870592
          %v986 = vunpack.c.0.s8 %v985
          %v987 = vlaneseq
          %v988 = vshrl.u32 %v987, 7
          %v989 = vsub.s32 %v986, %v988
          %v990 = vrot.slane %v982, %v989
          %v992 = vadd.f32 %v980, %v990
          %v993 = vstv %s348
          %v994 = vmul.f32 %v538, %v993
          %v995 = vadd.f32 %v992, %v994
          %v996 = vstv %s349
          %v997 = vmul.f32 %v558, %v996
          %v998 = vadd.f32 %v995, %v997
          %v999 = vstv %s350
          %v1000 = vmul.f32 %v578, %v999
          %v1001 = vadd.f32 %v998, %v1000
          %v1002 = vstv %s393
          %v1003 = vmul.f32 %v608, %v1002
          %v1004 = vadd.f32 %v1001, %v1003
          %v1005 = vstv %s394
          %v1006 = vmul.f32 %v627, %v1005
          %v1007 = vadd.f32 %v1004, %v1006
          %v1008 = vstv %s395
          %v1009 = vmul.f32 %v646, %v1008
          %v1010 = vadd.f32 %v1007, %v1009
          %v1011 = vstv %s396
          %v1012 = vmul.f32 %v322, %v1011
          %v1015 = vunpack.c.l.s4 857870592
          %v1016 = vunpack.c.0.s8 %v1015
          %v1017 = vlaneseq
          %v1018 = vshrl.u32 %v1017, 7
          %v1019 = vsub.s32 %v1016, %v1018
          %v1020 = vrot.slane %v1012, %v1019
          %v1022 = vadd.f32 %v1010, %v1020
          %v1023 = vstv %s397
          %v1024 = vmul.f32 %v665, %v1023
          %v1025 = vadd.f32 %v1022, %v1024
          %v1026 = vstv %s398
          %v1027 = vmul.f32 %v684, %v1026
          %v1028 = vadd.f32 %v1025, %v1027
          %v1029 = vstv %s399
          %v1030 = vmul.f32 %v703, %v1029
          %v1031 = vadd.f32 %v1028, %v1030
          %v1033 = vrot.slane %v1031, 7
          %v1034 = vrot.slane %v1033, 2
          %v1036 = vadd.f32 %v972, %v1034
          %v1037 = vstv %s351
          %v1038 = vmul.f32 %v478, %v1037
          %v1039 = vstv %s352
          %v1040 = vmul.f32 %v498, %v1039
          %v1041 = vadd.f32 %v1038, %v1040
          %v1042 = vstv %s353
          %v1043 = vmul.f32 %v518, %v1042
          %v1044 = vadd.f32 %v1041, %v1043
          %v1045 = vstv %s354
          %v1046 = vmul.f32 %v321, %v1045
          %v1049 = vunpack.c.l.s4 857870592
          %v1050 = vunpack.c.0.s8 %v1049
          %v1051 = vlaneseq
          %v1052 = vshrl.u32 %v1051, 7
          %v1053 = vsub.s32 %v1050, %v1052
          %v1054 = vrot.slane %v1046, %v1053
          %v1056 = vadd.f32 %v1044, %v1054
          %v1057 = vstv %s355
          %v1058 = vmul.f32 %v538, %v1057
          %v1059 = vadd.f32 %v1056, %v1058
          %v1060 = vstv %s356
          %v1061 = vmul.f32 %v558, %v1060
          %v1062 = vadd.f32 %v1059, %v1061
          %v1063 = vstv %s357
          %v1064 = vmul.f32 %v578, %v1063
          %v1065 = vadd.f32 %v1062, %v1064
          %v1066 = vstv %s400
          %v1067 = vmul.f32 %v608, %v1066
          %v1068 = vadd.f32 %v1065, %v1067
          %v1069 = vstv %s401
          %v1070 = vmul.f32 %v627, %v1069
          %v1071 = vadd.f32 %v1068, %v1070
          %v1072 = vstv %s402
          %v1073 = vmul.f32 %v646, %v1072
          %v1074 = vadd.f32 %v1071, %v1073
          %v1075 = vstv %s403
          %v1076 = vmul.f32 %v322, %v1075
          %v1079 = vunpack.c.l.s4 857870592
          %v1080 = vunpack.c.0.s8 %v1079
          %v1081 = vlaneseq
          %v1082 = vshrl.u32 %v1081, 7
          %v1083 = vsub.s32 %v1080, %v1082
          %v1084 = vrot.slane %v1076, %v1083
          %v1086 = vadd.f32 %v1074, %v1084
          %v1087 = vstv %s404
          %v1088 = vmul.f32 %v665, %v1087
          %v1089 = vadd.f32 %v1086, %v1088
          %v1090 = vstv %s405
          %v1091 = vmul.f32 %v684, %v1090
          %v1092 = vadd.f32 %v1089, %v1091
          %v1093 = vstv %s406
          %v1094 = vmul.f32 %v703, %v1093
          %v1095 = vadd.f32 %v1092, %v1094
          %v1097 = vlaneseq
          %v1098 = vshrl.u32 %v1097, 7
          %v1099 = vsub.s32 1, %v1098
          %v1100 = vrot.slane %v1095, %v1099
          %v1101 = vlaneseq
          %v1102 = vshrl.u32 %v1101, 7
          %v1103 = vsub.s32 3, %v1102
          %v1104 = vrot.slane %v1095, %v1103
          %1107 = vrot.lane.b32.xlu0 %v1100, 112
          %v1108 = vpop.permute.xlu0 %1107
          %1109 = vrot.lane.b32.xlu0 %v1104, 112
          %v1110 = vpop.permute.xlu0 %1109
          %vm1111 = vcmp.lt.s32.totalorder %v462, 112
          %v1112 = vsel %vm1111, %v1108, %v1110
          %v1113 = vsel %vm1111, %v1110, %v1108
          %v1116 = vcombine.low %v1112, %v1113
          %v1118 = vunpack.c.l.s4 1983009808
          %v1119 = vunpack.c.0.s8 %v1118
          %v1120 = vlaneseq
          %v1121 = vshrl.u32 %v1120, 7
          %v1122 = vsub.s32 %v1119, %v1121
          %v1123 = vrot.slane %v1116, %v1122
          %v1125 = vsel %vm437, %v1123, 0.0
          %v1126 = vadd.f32 %v1036, %v1125
          %v1127 = vstv %s358
          %v1128 = vmul.f32 %v478, %v1127
          %v1129 = vstv %s359
          %v1130 = vmul.f32 %v498, %v1129
          %v1131 = vadd.f32 %v1128, %v1130
          %v1132 = vstv %s360
          %v1133 = vmul.f32 %v518, %v1132
          %v1134 = vadd.f32 %v1131, %v1133
          %v1135 = vstv %s361
          %v1136 = vmul.f32 %v321, %v1135
          %v1139 = vunpack.c.l.s4 857870592
          %v1140 = vunpack.c.0.s8 %v1139
          %v1141 = vlaneseq
          %v1142 = vshrl.u32 %v1141, 7
          %v1143 = vsub.s32 %v1140, %v1142
          %v1144 = vrot.slane %v1136, %v1143
          %v1146 = vadd.f32 %v1134, %v1144
          %v1147 = vstv %s362
          %v1148 = vmul.f32 %v538, %v1147
          %v1149 = vadd.f32 %v1146, %v1148
          %v1150 = vstv %s363
          %v1151 = vmul.f32 %v558, %v1150
          %v1152 = vadd.f32 %v1149, %v1151
          %v1153 = vstv %s364
          %v1154 = vmul.f32 %v578, %v1153
          %v1155 = vadd.f32 %v1152, %v1154
          %v1156 = vstv %s407
          %v1157 = vmul.f32 %v608, %v1156
          %v1158 = vadd.f32 %v1155, %v1157
          %v1159 = vstv %s408
          %v1160 = vmul.f32 %v627, %v1159
          %v1161 = vadd.f32 %v1158, %v1160
          %v1162 = vstv %s409
          %v1163 = vmul.f32 %v646, %v1162
          %v1164 = vadd.f32 %v1161, %v1163
          %v1165 = vstv %s410
          %v1166 = vmul.f32 %v322, %v1165
          %v1169 = vunpack.c.l.s4 857870592
          %v1170 = vunpack.c.0.s8 %v1169
          %v1171 = vlaneseq
          %v1172 = vshrl.u32 %v1171, 7
          %v1173 = vsub.s32 %v1170, %v1172
          %v1174 = vrot.slane %v1166, %v1173
          %v1176 = vadd.f32 %v1164, %v1174
          %v1177 = vstv %s411
          %v1178 = vmul.f32 %v665, %v1177
          %v1179 = vadd.f32 %v1176, %v1178
          %v1180 = vstv %s412
          %v1181 = vmul.f32 %v684, %v1180
          %v1182 = vadd.f32 %v1179, %v1181
          %v1183 = vstv %s413
          %v1184 = vmul.f32 %v703, %v1183
          %v1185 = vadd.f32 %v1182, %v1184
          %v1187 = vlaneseq
          %v1188 = vshrl.u32 %v1187, 7
          %v1189 = vsub.s32 1, %v1188
          %v1190 = vrot.slane %v1185, %v1189
          %v1191 = vlaneseq
          %v1192 = vshrl.u32 %v1191, 7
          %v1193 = vsub.s32 3, %v1192
          %v1194 = vrot.slane %v1185, %v1193
          %1197 = vrot.lane.b32.xlu0 %v1190, 96
          %v1198 = vpop.permute.xlu0 %1197
          %1199 = vrot.lane.b32.xlu0 %v1194, 96
          %v1200 = vpop.permute.xlu0 %1199
          %vm1201 = vcmp.lt.s32.totalorder %v462, 96
          %v1202 = vsel %vm1201, %v1198, %v1200
          %v1203 = vsel %vm1201, %v1200, %v1198
          %v1206 = vcombine.low %v1202, %v1203
          %v1208 = vunpack.c.l.s4 1983009808
          %v1209 = vunpack.c.0.s8 %v1208
          %v1210 = vlaneseq
          %v1211 = vshrl.u32 %v1210, 7
          %v1212 = vsub.s32 %v1209, %v1211
          %v1213 = vrot.slane %v1206, %v1212
          %v1215 = vsel %vm441, %v1213, 0.0
          %v1216 = vadd.f32 %v1126, %v1215
          %v1217 = vstv %s365
          %v1218 = vmul.f32 %v478, %v1217
          %v1219 = vstv %s366
          %v1220 = vmul.f32 %v498, %v1219
          %v1221 = vadd.f32 %v1218, %v1220
          %v1222 = vstv %s367
          %v1223 = vmul.f32 %v518, %v1222
          %v1224 = vadd.f32 %v1221, %v1223
          %v1225 = vstv %s368
          %v1226 = vmul.f32 %v321, %v1225
          %v1229 = vunpack.c.l.s4 857870592
          %v1230 = vunpack.c.0.s8 %v1229
          %v1231 = vlaneseq
          %v1232 = vshrl.u32 %v1231, 7
          %v1233 = vsub.s32 %v1230, %v1232
          %v1234 = vrot.slane %v1226, %v1233
          %v1236 = vadd.f32 %v1224, %v1234
          %v1237 = vstv %s369
          %v1238 = vmul.f32 %v538, %v1237
          %v1239 = vadd.f32 %v1236, %v1238
          %v1240 = vstv %s370
          %v1241 = vmul.f32 %v558, %v1240
          %v1242 = vadd.f32 %v1239, %v1241
          %v1243 = vstv %s371
          %v1244 = vmul.f32 %v578, %v1243
          %v1245 = vadd.f32 %v1242, %v1244
          %v1246 = vstv %s414
          %v1247 = vmul.f32 %v608, %v1246
          %v1248 = vadd.f32 %v1245, %v1247
          %v1249 = vstv %s415
          %v1250 = vmul.f32 %v627, %v1249
          %v1251 = vadd.f32 %v1248, %v1250
          %v1252 = vstv %s416
          %v1253 = vmul.f32 %v646, %v1252
          %v1254 = vadd.f32 %v1251, %v1253
          %v1255 = vstv %s417
          %v1256 = vmul.f32 %v322, %v1255
          %v1259 = vunpack.c.l.s4 857870592
          %v1260 = vunpack.c.0.s8 %v1259
          %v1261 = vlaneseq
          %v1262 = vshrl.u32 %v1261, 7
          %v1263 = vsub.s32 %v1260, %v1262
          %v1264 = vrot.slane %v1256, %v1263
          %v1266 = vadd.f32 %v1254, %v1264
          %v1267 = vstv %s418
          %v1268 = vmul.f32 %v665, %v1267
          %v1269 = vadd.f32 %v1266, %v1268
          %v1270 = vstv %s419
          %v1271 = vmul.f32 %v684, %v1270
          %v1272 = vadd.f32 %v1269, %v1271
          %v1273 = vstv %s420
          %v1274 = vmul.f32 %v703, %v1273
          %v1275 = vadd.f32 %v1272, %v1274
          %v1277 = vlaneseq
          %v1278 = vshrl.u32 %v1277, 7
          %v1279 = vsub.s32 1, %v1278
          %v1280 = vrot.slane %v1275, %v1279
          %v1281 = vlaneseq
          %v1282 = vshrl.u32 %v1281, 7
          %v1283 = vsub.s32 3, %v1282
          %v1284 = vrot.slane %v1275, %v1283
          %1287 = vrot.lane.b32.xlu0 %v1280, 80
          %v1288 = vpop.permute.xlu0 %1287
          %1289 = vrot.lane.b32.xlu0 %v1284, 80
          %v1290 = vpop.permute.xlu0 %1289
          %vm1291 = vcmp.lt.s32.totalorder %v462, 80
          %v1292 = vsel %vm1291, %v1288, %v1290
          %v1293 = vsel %vm1291, %v1290, %v1288
          %v1296 = vcombine.low %v1292, %v1293
          %v1298 = vunpack.c.l.s4 1983009808
          %v1299 = vunpack.c.0.s8 %v1298
          %v1300 = vlaneseq
          %v1301 = vshrl.u32 %v1300, 7
          %v1302 = vsub.s32 %v1299, %v1301
          %v1303 = vrot.slane %v1296, %v1302
          %v1305 = vsel %vm445, %v1303, 0.0
          %v1306 = vadd.f32 %v1216, %v1305
          %v1307 = vxor.u32 %v1306, 2147483648
          %v1308 = vmul.f32 %v1307, 1.442695
          %v1309 = vpow.pop %v1308
          %v1310 = vadd.f32 %v1309, 1.0
          %v1311 = vrcp.pop %v1310
          %v1312 = vmul.f32 1.0, %v1311
          %v1315 = vunpack.c.l.s4 1966171168
          %v1316 = vunpack.c.0.s8 %v1315
          %v1317 = vlaneseq
          %v1318 = vshrl.u32 %v1317, 7
          %v1319 = vsub.s32 %v1316, %v1318
          %v1320 = vrot.slane %v1312, %v1319
          %1322 = vst.msk [vmem:[%s227] sm:$0x3] %vm294, %v1320
        $region52: #{tpu_custom_call.1} parent=31 // pred_fallthru
          _
        %s1323 = sand.u32 %s112, 1
        %s1324 = scalar_lea.sflag [#allocation6], %s1323
        %s1325 = sand.u32 %s112, 1
        %s1326 = smul.addr %s1325, 2
        %s1327 = scalar_lea.vmem [#allocation11], %s1326
        // Predicated region
        $region53: #{tpu_custom_call.1} parent=31 // pred_check
          %p1328 = pneg %p122
        $region54: #{tpu_custom_call.1} parent=31 // pred_check_branch
          %1330 = sbr.rel (%p1328) target = $region56
        $region55: #{tpu_custom_call.1} parent=31 // pred_region
          %s1332 = ssub.s32 32, 32
          %1333 = vsyncadd %s1324, %s1332
          %s1334 = smul.addr %s26, 2
          %s1335 = smul.addr %s1334, 16
          %s1336 = scalar_lea.hbm %s3, %s1335
          %s1338 = sshll.u32 %s1327, 4
          %s1339 = int_to_ptr.vmem [resolvable:$true] %s1338
          %1341 = dma.vmem_to_hbm [thread:$0]  %s1339, 32, %s1336, %s1324
        $region56: #{tpu_custom_call.1} parent=31 // pred_fallthru
          _
      $region32: #{tpu_custom_call.1} parent=5 // pred_fallthru
        _
      %p1342 = scmp.le.s32.totalorder 2, %s17
      // Predicated region
      $region57: #{tpu_custom_call.1} parent=5 // pred_check
        %p1343 = pneg %p1342
      $region58: #{tpu_custom_call.1} parent=5 // pred_check_branch
        %1345 = sbr.rel (%p1343) target = $region60
      $region59: #{tpu_custom_call.1} parent=5 // pred_region
        %s1346 = ssub.s32 %s17, 2
        // Predicated region
        $region61: #{tpu_custom_call.1} parent=59 // pred_check
          %p1347 = pneg %p128
        $region62: #{tpu_custom_call.1} parent=59 // pred_check_branch
          %1349 = sbr.rel (%p1347) target = $region64
        $region63: #{tpu_custom_call.1} parent=59 // pred_region
          %s1350 = sand.u32 %s113, 1
          %s1351 = scalar_lea.sflag [#allocation6], %s1350
          %s1352 = sand.u32 %s113, 1
          %s1353 = smul.addr %s1352, 2
          %s1354 = scalar_lea.vmem [#allocation11], %s1353
          %1355 = dma.done %s1351, 32
        $region64: #{tpu_custom_call.1} parent=59 // pred_fallthru
          _
      $region60: #{tpu_custom_call.1} parent=5 // pred_fallthru
        _
    $region6: #{tpu_custom_call.1} parent=1 // loop_footer
      %s21 = sadd.s32 1, %s17
    $region7: #{tpu_custom_call.1} parent=1 // loop_footer_branch
      %16 = sbr.rel target = $region3
    $region8: #{tpu_custom_call.1} parent=1 // loop_exit
      _
    %1356 = vsyncpa [#allocation5], 1
    %s1357 = scalar_lea.sflag [#allocation5], 1
    %1358 = vsyncpa %s1357, 1
    %1359 = vsyncpa [#allocation10], 1
    %s1360 = scalar_lea.sflag [#allocation10], 1
    %1361 = vsyncpa %s1360, 1
    %1362 = vsyncpa [#allocation6], 1
    %s1363 = scalar_lea.sflag [#allocation6], 1
    %1364 = vsyncpa %s1363, 1
    %1365 = vsyncpa [#allocation7], 1
    %s1366 = scalar_lea.sflag [#allocation7], 1
    %1367 = vsyncpa %s1366, 1

</llo_original>
